<compile_context>
chip_gen: v7x
topology: tpu7x:2x2x1
jax: 0.10.0
libtpu: 0.0.40
codegen_flags: <defaults>
</compile_context>

<pallas_src>
import functools

import jax
import jax.numpy as jnp
from jax import lax
from jax.experimental import pallas as pl
from jax.experimental.pallas import tpu as pltpu
import numpy as np


def _round_up(x, m):
    return ((x + m - 1) // m) * m


def _cnn_kernel(tok_ref, wec_ref, bconv_ref, wfc_ref, bfc_ref, out_ref):
    # tok_ref:   ((L+2)*TB, 1) int32  one token id per row; rows are position-
    #                                 major (pos = l+1, l in [-1, L]) / batch-minor.
    # wec_ref:   (Vp, 3*C)    bf16    tap-stacked fused embedding+conv weight;
    #                                 rows >= V (incl. the PAD id) are all-zero.
    # bconv_ref: (1, C)       f32
    # wfc_ref:   (P, C, NCp)  bf16    FC weight, NCp = num_classes padded to 128.
    # bfc_ref:   (1, NCp)     f32
    # out_ref:   (TB, NCp)    f32
    TBL2 = tok_ref.shape[0]
    Vp = wec_ref.shape[0]
    C = bconv_ref.shape[1]
    P, _, NCp = wfc_ref.shape
    TB = out_ref.shape[0]
    L = TBL2 // TB - 2
    n = L * TB

    # One compare builds the one-hot (exact in bf16: values are 0/1).
    tok = tok_ref[...]                                            # (TBL2, 1)
    iota = lax.broadcasted_iota(jnp.int32, (TBL2, Vp), 1)
    oh = (iota == tok).astype(jnp.bfloat16)                       # (TBL2, Vp)

    # Embedding lookup + all 3 conv taps in ONE bf16 MXU matmul (K=Vp, N=3*C).
    z = jnp.dot(oh, wec_ref[...], preferred_element_type=jnp.float32)  # (TBL2, 3C)

    # Conv1d(k=3, pad=1): the halo rows (PAD id) of z are exactly zero, so tap
    # combination is just static tile-aligned slices + adds (no rolls/masks):
    #   y[l*TB+b] = z[l*TB+b, tap0] + z[(l+1)*TB+b, tap1] + z[(l+2)*TB+b, tap2]
    y = (z[0:n, 0:C]
         + z[TB:TB + n, C:2 * C]
         + z[2 * TB:2 * TB + n, 2 * C:3 * C])
    y = jnp.maximum(y + bconv_ref[...], 0.0)                      # (L*TB, C)

    # MaxPool1d(2, 2): rows are l-major, so a pooling pair is two adjacent
    # TB-row slabs -> tile-aligned reshape + elementwise max.
    y4 = y.reshape(P, 2, TB, C)
    pooled = jnp.maximum(y4[:, 0], y4[:, 1]).astype(jnp.bfloat16)  # (P, TB, C)

    # FC: sum over P of (TB, C) @ (C, NCp) MXU matmuls reading the pooled slabs
    # in place (no (TB, P*C) relayout materialized; same MXU FLOPs).
    acc = jnp.zeros((TB, NCp), jnp.float32)
    for p in range(P):                                            # static unroll
        acc = acc + jnp.dot(pooled[p], wfc_ref[p],
                            preferred_element_type=jnp.float32)
    out_ref[...] = (acc + bfc_ref[...]).astype(out_ref.dtype)


def pack_cnn_params(emb_table, conv_w, conv_b, fc_w, fc_b):
    """One-time weight repacking (hoisted out of the per-call path)."""
    V, _E = emb_table.shape
    C = conv_w.shape[0]
    NC, PC = fc_w.shape
    P = PC // C
    Vp = _round_up(V + 1, 128)      # lane-dense one-hot K; exact MXU-depth mult.
    NCp = _round_up(NC, 128)        # lane-dense FC N / output block width

    # Fused embedding x conv weight, taps stacked along N: col = k*C + c.
    wtap = jnp.einsum('ve,cek->vkc', emb_table.astype(jnp.float32),
                      conv_w.astype(jnp.float32)).reshape(V, 3 * C)
    wec = jnp.zeros((Vp, 3 * C), jnp.float32).at[:V].set(wtap)
    wec = wec.astype(jnp.bfloat16)  # rows >= V (incl. PAD id Vp-1) stay zero

    bconv = conv_b.reshape(1, C).astype(jnp.float32)

    # PyTorch flatten order is c*P + p; the kernel consumes (P, C, NCp).
    wfc3 = jnp.transpose(fc_w.reshape(NC, C, P), (2, 1, 0))        # (P, C, NC)
    wfc3 = jnp.pad(wfc3, ((0, 0), (0, 0), (0, NCp - NC))).astype(jnp.bfloat16)
    bfc = jnp.pad(fc_b, (0, NCp - NC)).reshape(1, NCp).astype(jnp.float32)
    return {"wec": wec, "bconv": bconv, "wfc3": wfc3, "bfc": bfc}


def _pick_block_batch(B):
    # Large batch tiles fill the MXU's M dimension; keep >= 2 grid steps when
    # the batch allows it so both v7x TensorCores get work ("parallel" axis).
    if B >= 16:
        return min(256, _round_up(-(-B // 2), 8))
    return _round_up(max(B, 1), 8)


@functools.partial(jax.jit, static_argnames=("num_classes", "block_batch"))
def cnn_intent_classifier_forward(tokens, wec, bconv, wfc3, bfc, *,
                                  num_classes, block_batch=None):
    """tokens: (B, L) int32 in [0, vocab). Returns (B, num_classes) f32."""
    B, L = tokens.shape
    Vp = wec.shape[0]
    C = bconv.shape[1]
    P, _, NCp = wfc3.shape
    # TODO(synk): MaxPool1d(2,2) on odd L drops the trailing element in PyTorch;
    # this kernel assumes L is even (true for the module's max_length).
    assert L % 2 == 0 and P == L // 2
    # NOTE: token ids must lie in [0, vocab); out-of-range ids would silently
    # read a zero/padded weight row (PyTorch's nn.Embedding would raise).

    TB = block_batch if block_batch is not None else _pick_block_batch(B)
    TB = max(8, _round_up(TB, 8))
    nT = -(-B // TB)
    B_pad = nT * TB
    PADID = Vp - 1                     # any row >= V of wec is all-zero
    TBL2 = (L + 2) * TB

    tok = tokens.astype(jnp.int32)
    if B_pad != B:
        tok = jnp.pad(tok, ((0, B_pad - B), (0, 0)), constant_values=PADID)
    # Halo-pad positions l=-1 and l=L with PADID so the conv boundary taps read
    # an exactly-zero z row inside the kernel (no in-kernel masking needed).
    tok = jnp.pad(tok, ((0, 0), (1, 1)), constant_values=PADID)    # (B_pad, L+2)
    # Per-tile position-major / batch-minor row layout: row = pos*TB + b.
    tok_rows = (tok.reshape(nT, TB, L + 2)
                   .transpose(0, 2, 1)
                   .reshape(nT * TBL2, 1))

    # Raise the scoped-VMEM limit only when the per-step footprint would exceed
    # v5e's 16 MiB default (large TB); the demo config stays at defaults.
    vmem_est = (2 * (TBL2 * 128 * 4 + Vp * 3 * C * 2 + P * C * NCp * 2
                     + TB * NCp * 4)
                + TBL2 * (Vp * 2 + 3 * C * 4) + 2 * L * TB * C * 4)
    cp_kwargs = dict(dimension_semantics=("parallel",))
    if vmem_est > 16 * 1024 * 1024:
        cp_kwargs["vmem_limit_bytes"] = min(int(vmem_est * 3 // 2),
                                            64 * 1024 * 1024)

    out = pl.pallas_call(
        _cnn_kernel,
        out_shape=jax.ShapeDtypeStruct((B_pad, NCp), jnp.float32),
        grid_spec=pltpu.PrefetchScalarGridSpec(
            num_scalar_prefetch=0,
            grid=(nT,),
            in_specs=[
                pl.BlockSpec((TBL2, 1), lambda i: (i, 0)),
                # Grid-invariant weights (constant index maps -> re-DMA skipped).
                pl.BlockSpec((Vp, 3 * C), lambda i: (0, 0)),
                pl.BlockSpec((1, C), lambda i: (0, 0)),
                pl.BlockSpec((P, C, NCp), lambda i: (0, 0, 0)),
                pl.BlockSpec((1, NCp), lambda i: (0, 0)),
            ],
            out_specs=pl.BlockSpec((TB, NCp), lambda i: (i, 0)),
        ),
        compiler_params=pltpu.CompilerParams(**cp_kwargs),
    )(tok_rows, wec, bconv, wfc3, bfc)

    return out[:B, :num_classes]


def _reference_forward(tokens, emb_table, conv_w, conv_b, fc_w, fc_b):
    """Plain-JAX reference mirroring the PyTorch module (NCW conv)."""
    B, L = tokens.shape
    x = jnp.take(emb_table, tokens, axis=0)                 # (B, L, E)
    xc = jnp.transpose(x, (0, 2, 1))                        # (B, E, L)
    y = lax.conv_general_dilated(
        xc, conv_w, window_strides=(1,), padding=[(1, 1)],
        dimension_numbers=("NCH", "OIH", "NCH"),
    ) + conv_b[None, :, None]                               # (B, C, L)
    y = jnp.maximum(y, 0.0)
    pooled = jnp.max(y.reshape(B, y.shape[1], L // 2, 2), axis=-1)
    flat = pooled.reshape(B, -1)                            # channel-major flatten
    return flat @ fc_w.T + fc_b


if __name__ == "__main__":
    # Small, deterministic configuration.
    vocab_size = 64
    embed_dim = 32
    num_classes = 10
    max_length = 16
    batch = 32          # adaptive tiling -> TB=16, two parallel grid steps
    conv_ch = 128

    key = jax.random.PRNGKey(0)
    k_tok, k_emb, k_cw, k_cb, k_fw, k_fb = jax.random.split(key, 6)

    tokens = jax.random.randint(k_tok, (batch, max_length), 0, vocab_size,
                                dtype=jnp.int32)
    emb_table = 0.1 * jax.random.normal(k_emb, (vocab_size, embed_dim),
                                        dtype=jnp.float32)
    conv_w = 0.1 * jax.random.normal(k_cw, (conv_ch, embed_dim, 3),
                                     dtype=jnp.float32)
    conv_b = 0.1 * jax.random.normal(k_cb, (conv_ch,), dtype=jnp.float32)
    fc_w = 0.1 * jax.random.normal(k_fw, (num_classes,
                                          conv_ch * (max_length // 2)),
                                   dtype=jnp.float32)
    fc_b = 0.1 * jax.random.normal(k_fb, (num_classes,), dtype=jnp.float32)

    packed = pack_cnn_params(emb_table, conv_w, conv_b, fc_w, fc_b)
    out = cnn_intent_classifier_forward(
        tokens, packed["wec"], packed["bconv"], packed["wfc3"], packed["bfc"],
        num_classes=num_classes)
    out = jax.block_until_ready(out)

    ref = _reference_forward(tokens, emb_table, conv_w, conv_b, fc_w, fc_b)
    # bf16 MXU inputs (f32 accumulation) -> loosened tolerance vs f32 reference.
    np.testing.assert_allclose(np.asarray(out), np.asarray(ref),
                               rtol=2e-2, atol=2e-2)

    print("KERNEL_OK")
</pallas_src>

<mosaic_0001>
module attributes {stable_mosaic.version = 11 : i64} {
  func.func @_cnn_kernel(%arg0: i32, %arg1: memref<288x1xi32, #tpu.memory_space<vmem>>, %arg2: memref<128x384xbf16, #tpu.memory_space<vmem>>, %arg3: memref<1x128xf32, #tpu.memory_space<vmem>>, %arg4: memref<8x128x128xbf16, #tpu.memory_space<vmem>>, %arg5: memref<1x128xf32, #tpu.memory_space<vmem>>, %arg6: memref<16x128xf32, #tpu.memory_space<vmem>>) attributes {dimension_semantics = [#tpu.dimension_semantics<parallel>], iteration_bounds = array<i64: 2>, scalar_prefetch = 0 : i64, scratch_operands = 0 : i64, tpu.core_type = #tpu.core_type<tc>, window_params = [{transform_indices = @transform_0, window_bounds = array<i64: 288, 1>}, {pipeline_mode = #tpu.pipeline_mode<synchronous>, transform_indices = @transform_1, window_bounds = array<i64: 128, 384>}, {pipeline_mode = #tpu.pipeline_mode<synchronous>, transform_indices = @transform_2, window_bounds = array<i64: 1, 128>}, {pipeline_mode = #tpu.pipeline_mode<synchronous>, transform_indices = @transform_3, window_bounds = array<i64: 8, 128, 128>}, {pipeline_mode = #tpu.pipeline_mode<synchronous>, transform_indices = @transform_4, window_bounds = array<i64: 1, 128>}, {transform_indices = @transform_5, window_bounds = array<i64: 16, 128>}]} {
    %c0 = arith.constant 0 : index
    %c0_0 = arith.constant 0 : index
    %0 = vector.load %arg1[%c0, %c0_0] : memref<288x1xi32, #tpu.memory_space<vmem>>, vector<288x1xi32>
    %1 = tpu.iota {dimensions = array<i32: 1>} : vector<288x128xi32>
    %2 = vector.broadcast %0 : vector<288x1xi32> to vector<288x128xi32>
    %3 = arith.cmpi eq, %1, %2 : vector<288x128xi32>
    %4 = arith.extui %3 : vector<288x128xi1> to vector<288x128xi32>
    %5 = arith.sitofp %4 : vector<288x128xi32> to vector<288x128xf32>
    %6 = arith.truncf %5 : vector<288x128xf32> to vector<288x128xbf16>
    %c0_1 = arith.constant 0 : index
    %c0_2 = arith.constant 0 : index
    %7 = vector.load %arg2[%c0_1, %c0_2] : memref<128x384xbf16, #tpu.memory_space<vmem>>, vector<128x384xbf16>
    %cst = arith.constant dense<0.000000e+00> : vector<288x384xf32>
    %8 = tpu.matmul %6, %7, %cst {dimension_numbers = #tpu.dot_dimension_numbers<[1], [0], [0], [1], [0, 0, 1, 1], [], []>} : vector<288x128xbf16>, vector<128x384xbf16>, vector<288x384xf32> -> vector<288x384xf32>
    %9 = vector.extract_strided_slice %8 {offsets = [0, 0], sizes = [256, 128], strides = [1, 1]} : vector<288x384xf32> to vector<256x128xf32>
    %10 = vector.extract_strided_slice %8 {offsets = [16, 128], sizes = [256, 128], strides = [1, 1]} : vector<288x384xf32> to vector<256x128xf32>
    %11 = arith.addf %9, %10 : vector<256x128xf32>
    %12 = vector.extract_strided_slice %8 {offsets = [32, 256], sizes = [256, 128], strides = [1, 1]} : vector<288x384xf32> to vector<256x128xf32>
    %13 = arith.addf %11, %12 : vector<256x128xf32>
    %c0_3 = arith.constant 0 : index
    %c0_4 = arith.constant 0 : index
    %14 = vector.load %arg3[%c0_3, %c0_4] : memref<1x128xf32, #tpu.memory_space<vmem>>, vector<1x128xf32>
    %15 = vector.broadcast %14 : vector<1x128xf32> to vector<256x128xf32>
    %16 = arith.addf %13, %15 : vector<256x128xf32>
    %cst_5 = arith.constant 0.000000e+00 : f32
    %17 = vector.broadcast %cst_5 : f32 to vector<256x128xf32>
    %18 = arith.maximumf %16, %17 : vector<256x128xf32>
    %19 = vector.shape_cast %18 : vector<256x128xf32> to vector<8x2x16x128xf32>
    %20 = vector.extract_strided_slice %19 {offsets = [0, 0, 0, 0], sizes = [8, 1, 16, 128], strides = [1, 1, 1, 1]} : vector<8x2x16x128xf32> to vector<8x1x16x128xf32>
    %21 = vector.shape_cast %20 : vector<8x1x16x128xf32> to vector<8x16x128xf32>
    %22 = vector.extract_strided_slice %19 {offsets = [0, 1, 0, 0], sizes = [8, 1, 16, 128], strides = [1, 1, 1, 1]} : vector<8x2x16x128xf32> to vector<8x1x16x128xf32>
    %23 = vector.shape_cast %22 : vector<8x1x16x128xf32> to vector<8x16x128xf32>
    %24 = arith.maximumf %21, %23 : vector<8x16x128xf32>
    %25 = arith.truncf %24 : vector<8x16x128xf32> to vector<8x16x128xbf16>
    %cst_6 = arith.constant 0.000000e+00 : f32
    %26 = vector.broadcast %cst_6 : f32 to vector<16x128xf32>
    %27 = vector.extract_strided_slice %25 {offsets = [0, 0, 0], sizes = [1, 16, 128], strides = [1, 1, 1]} : vector<8x16x128xbf16> to vector<1x16x128xbf16>
    %28 = vector.shape_cast %27 : vector<1x16x128xbf16> to vector<16x128xbf16>
    %c0_7 = arith.constant 0 : index
    %c0_8 = arith.constant 0 : index
    %c0_9 = arith.constant 0 : index
    %29 = vector.load %arg4[%c0_7, %c0_8, %c0_9] : memref<8x128x128xbf16, #tpu.memory_space<vmem>>, vector<1x128x128xbf16>
    %30 = vector.shape_cast %29 : vector<1x128x128xbf16> to vector<128x128xbf16>
    %cst_10 = arith.constant dense<0.000000e+00> : vector<16x128xf32>
    %31 = tpu.matmul %28, %30, %cst_10 {dimension_numbers = #tpu.dot_dimension_numbers<[1], [0], [0], [1], [0, 0, 1, 1], [], []>} : vector<16x128xbf16>, vector<128x128xbf16>, vector<16x128xf32> -> vector<16x128xf32>
    %32 = arith.addf %26, %31 : vector<16x128xf32>
    %33 = vector.extract_strided_slice %25 {offsets = [1, 0, 0], sizes = [1, 16, 128], strides = [1, 1, 1]} : vector<8x16x128xbf16> to vector<1x16x128xbf16>
    %34 = vector.shape_cast %33 : vector<1x16x128xbf16> to vector<16x128xbf16>
    %c1 = arith.constant 1 : index
    %c0_11 = arith.constant 0 : index
    %c0_12 = arith.constant 0 : index
    %35 = vector.load %arg4[%c1, %c0_11, %c0_12] : memref<8x128x128xbf16, #tpu.memory_space<vmem>>, vector<1x128x128xbf16>
    %36 = vector.shape_cast %35 : vector<1x128x128xbf16> to vector<128x128xbf16>
    %cst_13 = arith.constant dense<0.000000e+00> : vector<16x128xf32>
    %37 = tpu.matmul %34, %36, %cst_13 {dimension_numbers = #tpu.dot_dimension_numbers<[1], [0], [0], [1], [0, 0, 1, 1], [], []>} : vector<16x128xbf16>, vector<128x128xbf16>, vector<16x128xf32> -> vector<16x128xf32>
    %38 = arith.addf %32, %37 : vector<16x128xf32>
    %39 = vector.extract_strided_slice %25 {offsets = [2, 0, 0], sizes = [1, 16, 128], strides = [1, 1, 1]} : vector<8x16x128xbf16> to vector<1x16x128xbf16>
    %40 = vector.shape_cast %39 : vector<1x16x128xbf16> to vector<16x128xbf16>
    %c2 = arith.constant 2 : index
    %c0_14 = arith.constant 0 : index
    %c0_15 = arith.constant 0 : index
    %41 = vector.load %arg4[%c2, %c0_14, %c0_15] : memref<8x128x128xbf16, #tpu.memory_space<vmem>>, vector<1x128x128xbf16>
    %42 = vector.shape_cast %41 : vector<1x128x128xbf16> to vector<128x128xbf16>
    %cst_16 = arith.constant dense<0.000000e+00> : vector<16x128xf32>
    %43 = tpu.matmul %40, %42, %cst_16 {dimension_numbers = #tpu.dot_dimension_numbers<[1], [0], [0], [1], [0, 0, 1, 1], [], []>} : vector<16x128xbf16>, vector<128x128xbf16>, vector<16x128xf32> -> vector<16x128xf32>
    %44 = arith.addf %38, %43 : vector<16x128xf32>
    %45 = vector.extract_strided_slice %25 {offsets = [3, 0, 0], sizes = [1, 16, 128], strides = [1, 1, 1]} : vector<8x16x128xbf16> to vector<1x16x128xbf16>
    %46 = vector.shape_cast %45 : vector<1x16x128xbf16> to vector<16x128xbf16>
    %c3 = arith.constant 3 : index
    %c0_17 = arith.constant 0 : index
    %c0_18 = arith.constant 0 : index
    %47 = vector.load %arg4[%c3, %c0_17, %c0_18] : memref<8x128x128xbf16, #tpu.memory_space<vmem>>, vector<1x128x128xbf16>
    %48 = vector.shape_cast %47 : vector<1x128x128xbf16> to vector<128x128xbf16>
    %cst_19 = arith.constant dense<0.000000e+00> : vector<16x128xf32>
    %49 = tpu.matmul %46, %48, %cst_19 {dimension_numbers = #tpu.dot_dimension_numbers<[1], [0], [0], [1], [0, 0, 1, 1], [], []>} : vector<16x128xbf16>, vector<128x128xbf16>, vector<16x128xf32> -> vector<16x128xf32>
    %50 = arith.addf %44, %49 : vector<16x128xf32>
    %51 = vector.extract_strided_slice %25 {offsets = [4, 0, 0], sizes = [1, 16, 128], strides = [1, 1, 1]} : vector<8x16x128xbf16> to vector<1x16x128xbf16>
    %52 = vector.shape_cast %51 : vector<1x16x128xbf16> to vector<16x128xbf16>
    %c4 = arith.constant 4 : index
    %c0_20 = arith.constant 0 : index
    %c0_21 = arith.constant 0 : index
    %53 = vector.load %arg4[%c4, %c0_20, %c0_21] : memref<8x128x128xbf16, #tpu.memory_space<vmem>>, vector<1x128x128xbf16>
    %54 = vector.shape_cast %53 : vector<1x128x128xbf16> to vector<128x128xbf16>
    %cst_22 = arith.constant dense<0.000000e+00> : vector<16x128xf32>
    %55 = tpu.matmul %52, %54, %cst_22 {dimension_numbers = #tpu.dot_dimension_numbers<[1], [0], [0], [1], [0, 0, 1, 1], [], []>} : vector<16x128xbf16>, vector<128x128xbf16>, vector<16x128xf32> -> vector<16x128xf32>
    %56 = arith.addf %50, %55 : vector<16x128xf32>
    %57 = vector.extract_strided_slice %25 {offsets = [5, 0, 0], sizes = [1, 16, 128], strides = [1, 1, 1]} : vector<8x16x128xbf16> to vector<1x16x128xbf16>
    %58 = vector.shape_cast %57 : vector<1x16x128xbf16> to vector<16x128xbf16>
    %c5 = arith.constant 5 : index
    %c0_23 = arith.constant 0 : index
    %c0_24 = arith.constant 0 : index
    %59 = vector.load %arg4[%c5, %c0_23, %c0_24] : memref<8x128x128xbf16, #tpu.memory_space<vmem>>, vector<1x128x128xbf16>
    %60 = vector.shape_cast %59 : vector<1x128x128xbf16> to vector<128x128xbf16>
    %cst_25 = arith.constant dense<0.000000e+00> : vector<16x128xf32>
    %61 = tpu.matmul %58, %60, %cst_25 {dimension_numbers = #tpu.dot_dimension_numbers<[1], [0], [0], [1], [0, 0, 1, 1], [], []>} : vector<16x128xbf16>, vector<128x128xbf16>, vector<16x128xf32> -> vector<16x128xf32>
    %62 = arith.addf %56, %61 : vector<16x128xf32>
    %63 = vector.extract_strided_slice %25 {offsets = [6, 0, 0], sizes = [1, 16, 128], strides = [1, 1, 1]} : vector<8x16x128xbf16> to vector<1x16x128xbf16>
    %64 = vector.shape_cast %63 : vector<1x16x128xbf16> to vector<16x128xbf16>
    %c6 = arith.constant 6 : index
    %c0_26 = arith.constant 0 : index
    %c0_27 = arith.constant 0 : index
    %65 = vector.load %arg4[%c6, %c0_26, %c0_27] : memref<8x128x128xbf16, #tpu.memory_space<vmem>>, vector<1x128x128xbf16>
    %66 = vector.shape_cast %65 : vector<1x128x128xbf16> to vector<128x128xbf16>
    %cst_28 = arith.constant dense<0.000000e+00> : vector<16x128xf32>
    %67 = tpu.matmul %64, %66, %cst_28 {dimension_numbers = #tpu.dot_dimension_numbers<[1], [0], [0], [1], [0, 0, 1, 1], [], []>} : vector<16x128xbf16>, vector<128x128xbf16>, vector<16x128xf32> -> vector<16x128xf32>
    %68 = arith.addf %62, %67 : vector<16x128xf32>
    %69 = vector.extract_strided_slice %25 {offsets = [7, 0, 0], sizes = [1, 16, 128], strides = [1, 1, 1]} : vector<8x16x128xbf16> to vector<1x16x128xbf16>
    %70 = vector.shape_cast %69 : vector<1x16x128xbf16> to vector<16x128xbf16>
    %c7 = arith.constant 7 : index
    %c0_29 = arith.constant 0 : index
    %c0_30 = arith.constant 0 : index
    %71 = vector.load %arg4[%c7, %c0_29, %c0_30] : memref<8x128x128xbf16, #tpu.memory_space<vmem>>, vector<1x128x128xbf16>
    %72 = vector.shape_cast %71 : vector<1x128x128xbf16> to vector<128x128xbf16>
    %cst_31 = arith.constant dense<0.000000e+00> : vector<16x128xf32>
    %73 = tpu.matmul %70, %72, %cst_31 {dimension_numbers = #tpu.dot_dimension_numbers<[1], [0], [0], [1], [0, 0, 1, 1], [], []>} : vector<16x128xbf16>, vector<128x128xbf16>, vector<16x128xf32> -> vector<16x128xf32>
    %74 = arith.addf %68, %73 : vector<16x128xf32>
    %c0_32 = arith.constant 0 : index
    %c0_33 = arith.constant 0 : index
    %75 = vector.load %arg5[%c0_32, %c0_33] : memref<1x128xf32, #tpu.memory_space<vmem>>, vector<1x128xf32>
    %76 = vector.broadcast %75 : vector<1x128xf32> to vector<16x128xf32>
    %77 = arith.addf %74, %76 : vector<16x128xf32>
    %c0_34 = arith.constant 0 : index
    %c0_35 = arith.constant 0 : index
    %78 = vector.load %arg6[%c0_34, %c0_35] : memref<16x128xf32, #tpu.memory_space<vmem>>, vector<16x128xf32>
    tpu.vector_store %arg6[%c0_34, %c0_35], %77 {strides = array<i32>} : memref<16x128xf32, #tpu.memory_space<vmem>>, vector<16x128xf32>,
    return
  }
  func.func @transform_0(%arg0: i32) -> (i32, i32) {
    %c0_i32 = arith.constant 0 : i32
    %c0_i32_0 = arith.constant 0 : i32
    return %arg0, %c0_i32 : i32, i32
  }
  func.func @transform_1(%arg0: i32) -> (i32, i32) {
    %c0_i32 = arith.constant 0 : i32
    %c0_i32_0 = arith.constant 0 : i32
    %c0_i32_1 = arith.constant 0 : i32
    return %c0_i32, %c0_i32_0 : i32, i32
  }
  func.func @transform_2(%arg0: i32) -> (i32, i32) {
    %c0_i32 = arith.constant 0 : i32
    %c0_i32_0 = arith.constant 0 : i32
    %c0_i32_1 = arith.constant 0 : i32
    return %c0_i32, %c0_i32_0 : i32, i32
  }
  func.func @transform_3(%arg0: i32) -> (i32, i32, i32) {
    %c0_i32 = arith.constant 0 : i32
    %c0_i32_0 = arith.constant 0 : i32
    %c0_i32_1 = arith.constant 0 : i32
    %c0_i32_2 = arith.constant 0 : i32
    return %c0_i32, %c0_i32_0, %c0_i32_1 : i32, i32, i32
  }
  func.func @transform_4(%arg0: i32) -> (i32, i32) {
    %c0_i32 = arith.constant 0 : i32
    %c0_i32_0 = arith.constant 0 : i32
    %c0_i32_1 = arith.constant 0 : i32
    return %c0_i32, %c0_i32_0 : i32, i32
  }
  func.func @transform_5(%arg0: i32) -> (i32, i32) {
    %c0_i32 = arith.constant 0 : i32
    %c0_i32_0 = arith.constant 0 : i32
    return %arg0, %c0_i32 : i32, i32
  }
}

</mosaic_0001>

<llo_original>
// kernel: cnn_intent_classifier_forward.1
$region0: #{cnn_intent_classifier_forward.1}
  #allocation0 [shape = 'u32[]', space=smem, size = 0x4, offset = 0x4, fixed_abs, tag = 'smem constant byte address 0x4 - core index']
  #allocation1 [shape = 'u32[144,128]{1,0:T(1,128)}', space=vmem, size = 0x12000, scoped, tag = 'internal scratch']
  %s0 = inlined_call_operand.vmem [shape: s32[576,1], index: 0, kind: input, shape index: {}]
  %s1 = inlined_call_operand.vmem [shape: bf16[128,384], index: 1, kind: input, shape index: {}]
  %s2 = inlined_call_operand.vmem [shape: f32[1,128], index: 2, kind: input, shape index: {}]
  %s3 = inlined_call_operand.vmem [shape: bf16[8,128,128], index: 3, kind: input, shape index: {}]
  %s4 = inlined_call_operand.vmem [shape: f32[1,128], index: 4, kind: input, shape index: {}]
  %s5 = inlined_call_operand.vmem [shape: f32[32,128], index: 5, kind: output, shape index: {}]
  %s6 = sld [smem:[#allocation0]]
  $region53: #{cnn_intent_classifier_forward.1} parent=0
    _
  %s8 = ssub.s32 1, %s6
  %s9 = scalar_select 0, %s8, %s6
  loop: start=0, step=1, limit=4
  $region2: #{cnn_intent_classifier_forward.1} parent=0 // loop_pre_header
    _
  $region3: #{cnn_intent_classifier_forward.1} parent=0 // loop_header
    %s11 = sphi 0, %s15
    %p12 = scmp.ge.s32.totalorder %s11, 4
    %s21 = sphi 0, %s23
    %s24 = sphi 0, %s21
    %s25 = sphi 0, %s24
    %s41 = sphi 0, %s25
    %s45 = sphi 0, %s45
    %s47 = sphi 0, %s45
    %s48 = sphi 0, %s47
    %s62 = sphi 0, %s48
    %s66 = sphi 0, %s66
    %s68 = sphi 0, %s66
    %s69 = sphi 0, %s68
    %s83 = sphi 0, %s69
    %s87 = sphi 0, %s87
    %s89 = sphi 0, %s87
    %s90 = sphi 0, %s89
    %s104 = sphi 0, %s90
    %s108 = sphi 0, %s108
    %s110 = sphi 0, %s108
    %s111 = sphi 0, %s110
    %s125 = sphi 0, %s111
    %s131 = sphi 0, %s133
    %s134 = sphi 0, %s131
    %s135 = sphi 0, %s134
    %s151 = sphi 0, %s135
  $region4: #{cnn_intent_classifier_forward.1} parent=0 // loop_header_branch
    %14 = sbr.rel (%p12) target = $region8
  $region5: #{cnn_intent_classifier_forward.1} parent=0 // loop_body
    %s16 = ssub.s32 %s11, 1
    %s17 = ssub.s32 %s11, 2
    %s18 = sadd.s32 %s11, 1
    %s19 = ssub.s32 %s11, %s18
    %p20 = scmp.eq.s32.totalorder %s19, 0
    %s22 = sadd.s32 %s21, 1
    %s23 = scalar_select %p20, %s21, %s22
    %p26 = pneg %p20
    %p27 = scmp.eq.s32.totalorder %s11, 1
    %p28 = por %p26, %p27
    %p29 = scmp.ne.s32.totalorder %s21, %s24
    %p30 = scmp.eq.s32.totalorder %s11, 0
    %p31 = por %p29, %p30
    %p32 = scmp.ne.s32.totalorder %s21, %s24
    %p33 = scmp.eq.s32.totalorder %s16, 1
    %p34 = por %p32, %p33
    %p35 = scmp.ne.s32.totalorder %s24, %s25
    %p36 = scmp.eq.s32.totalorder %s16, 0
    %p37 = por %p35, %p36
    %p38 = scmp.ne.s32.totalorder %s24, %s25
    %p39 = scmp.eq.s32.totalorder %s17, 1
    %p40 = por %p38, %p39
    %p42 = scmp.ne.s32.totalorder %s25, %s41
    %p43 = scmp.eq.s32.totalorder %s17, 0
    %p44 = por %p42, %p43
    %s46 = sadd.s32 %s45, 1
    %p49 = scmp.eq.s32.totalorder %s11, 1
    %p50 = scmp.ne.s32.totalorder %s45, %s47
    %p51 = scmp.eq.s32.totalorder %s11, 0
    %p52 = por %p50, %p51
    %p53 = scmp.ne.s32.totalorder %s45, %s47
    %p54 = scmp.eq.s32.totalorder %s16, 1
    %p55 = por %p53, %p54
    %p56 = scmp.ne.s32.totalorder %s47, %s48
    %p57 = scmp.eq.s32.totalorder %s16, 0
    %p58 = por %p56, %p57
    %p59 = scmp.ne.s32.totalorder %s47, %s48
    %p60 = scmp.eq.s32.totalorder %s17, 1
    %p61 = por %p59, %p60
    %p63 = scmp.ne.s32.totalorder %s48, %s62
    %p64 = scmp.eq.s32.totalorder %s17, 0
    %p65 = por %p63, %p64
    %s67 = sadd.s32 %s66, 1
    %p70 = scmp.eq.s32.totalorder %s11, 1
    %p71 = scmp.ne.s32.totalorder %s66, %s68
    %p72 = scmp.eq.s32.totalorder %s11, 0
    %p73 = por %p71, %p72
    %p74 = scmp.ne.s32.totalorder %s66, %s68
    %p75 = scmp.eq.s32.totalorder %s16, 1
    %p76 = por %p74, %p75
    %p77 = scmp.ne.s32.totalorder %s68, %s69
    %p78 = scmp.eq.s32.totalorder %s16, 0
    %p79 = por %p77, %p78
    %p80 = scmp.ne.s32.totalorder %s68, %s69
    %p81 = scmp.eq.s32.totalorder %s17, 1
    %p82 = por %p80, %p81
    %p84 = scmp.ne.s32.totalorder %s69, %s83
    %p85 = scmp.eq.s32.totalorder %s17, 0
    %p86 = por %p84, %p85
    %s88 = sadd.s32 %s87, 1
    %p91 = scmp.eq.s32.totalorder %s11, 1
    %p92 = scmp.ne.s32.totalorder %s87, %s89
    %p93 = scmp.eq.s32.totalorder %s11, 0
    %p94 = por %p92, %p93
    %p95 = scmp.ne.s32.totalorder %s87, %s89
    %p96 = scmp.eq.s32.totalorder %s16, 1
    %p97 = por %p95, %p96
    %p98 = scmp.ne.s32.totalorder %s89, %s90
    %p99 = scmp.eq.s32.totalorder %s16, 0
    %p100 = por %p98, %p99
    %p101 = scmp.ne.s32.totalorder %s89, %s90
    %p102 = scmp.eq.s32.totalorder %s17, 1
    %p103 = por %p101, %p102
    %p105 = scmp.ne.s32.totalorder %s90, %s104
    %p106 = scmp.eq.s32.totalorder %s17, 0
    %p107 = por %p105, %p106
    %s109 = sadd.s32 %s108, 1
    %p112 = scmp.eq.s32.totalorder %s11, 1
    %p113 = scmp.ne.s32.totalorder %s108, %s110
    %p114 = scmp.eq.s32.totalorder %s11, 0
    %p115 = por %p113, %p114
    %p116 = scmp.ne.s32.totalorder %s108, %s110
    %p117 = scmp.eq.s32.totalorder %s16, 1
    %p118 = por %p116, %p117
    %p119 = scmp.ne.s32.totalorder %s110, %s111
    %p120 = scmp.eq.s32.totalorder %s16, 0
    %p121 = por %p119, %p120
    %p122 = scmp.ne.s32.totalorder %s110, %s111
    %p123 = scmp.eq.s32.totalorder %s17, 1
    %p124 = por %p122, %p123
    %p126 = scmp.ne.s32.totalorder %s111, %s125
    %p127 = scmp.eq.s32.totalorder %s17, 0
    %p128 = por %p126, %p127
    %s129 = ssub.s32 %s11, %s18
    %p130 = scmp.eq.s32.totalorder %s129, 0
    %s132 = sadd.s32 %s131, 1
    %s133 = scalar_select %p130, %s131, %s132
    %p136 = pneg %p130
    %p137 = scmp.eq.s32.totalorder %s11, 1
    %p138 = por %p136, %p137
    %p139 = scmp.ne.s32.totalorder %s131, %s134
    %p140 = scmp.eq.s32.totalorder %s11, 0
    %p141 = por %p139, %p140
    %p142 = scmp.ne.s32.totalorder %s131, %s134
    %p143 = scmp.eq.s32.totalorder %s16, 1
    %p144 = por %p142, %p143
    %p145 = scmp.ne.s32.totalorder %s134, %s135
    %p146 = scmp.eq.s32.totalorder %s16, 0
    %p147 = por %p145, %p146
    %p148 = scmp.ne.s32.totalorder %s134, %s135
    %p149 = scmp.eq.s32.totalorder %s17, 1
    %p150 = por %p148, %p149
    %p152 = scmp.ne.s32.totalorder %s135, %s151
    %p153 = scmp.eq.s32.totalorder %s17, 0
    %p154 = por %p152, %p153
    %p155 = scmp.le.s32.totalorder 1, %s11
    %p156 = scmp.lt.s32.totalorder %s11, 3
    %p157 = pnand %p155, %p156
    %p158 = pneg %p157
    // Predicated region
    $region9: #{cnn_intent_classifier_forward.1} parent=5 // pred_check
      _
    $region10: #{cnn_intent_classifier_forward.1} parent=5 // pred_check_branch
      %160 = sbr.rel (%p157) target = $region12
    $region11: #{cnn_intent_classifier_forward.1} parent=5 // pred_region
      %s161 = ssub.s32 %s11, 1
      // Predicated region
      $region13: #{cnn_intent_classifier_forward.1} parent=11 // pred_check
        %p162 = pneg %p58
      $region14: #{cnn_intent_classifier_forward.1} parent=11 // pred_check_branch
        %164 = sbr.rel (%p162) target = $region16
      $region15: #{cnn_intent_classifier_forward.1} parent=11 // pred_region
        _
      $region16: #{cnn_intent_classifier_forward.1} parent=11 // pred_fallthru
        _
      // Predicated region
      $region17: #{cnn_intent_classifier_forward.1} parent=11 // pred_check
        %p165 = pneg %p79
      $region18: #{cnn_intent_classifier_forward.1} parent=11 // pred_check_branch
        %167 = sbr.rel (%p165) target = $region20
      $region19: #{cnn_intent_classifier_forward.1} parent=11 // pred_region
        _
      $region20: #{cnn_intent_classifier_forward.1} parent=11 // pred_fallthru
        _
      // Predicated region
      $region21: #{cnn_intent_classifier_forward.1} parent=11 // pred_check
        %p168 = pneg %p100
      $region22: #{cnn_intent_classifier_forward.1} parent=11 // pred_check_branch
        %170 = sbr.rel (%p168) target = $region24
      $region23: #{cnn_intent_classifier_forward.1} parent=11 // pred_region
        _
      $region24: #{cnn_intent_classifier_forward.1} parent=11 // pred_fallthru
        _
      // Predicated region
      $region25: #{cnn_intent_classifier_forward.1} parent=11 // pred_check
        %p171 = pneg %p121
      $region26: #{cnn_intent_classifier_forward.1} parent=11 // pred_check_branch
        %173 = sbr.rel (%p171) target = $region28
      $region27: #{cnn_intent_classifier_forward.1} parent=11 // pred_region
        _
      $region28: #{cnn_intent_classifier_forward.1} parent=11 // pred_fallthru
        _
    $region12: #{cnn_intent_classifier_forward.1} parent=5 // pred_fallthru
      _
    %p174 = scmp.lt.s32.totalorder %s11, 2
    // Predicated region
    $region29: #{cnn_intent_classifier_forward.1} parent=5 // pred_check
      %p175 = pneg %p174
    $region30: #{cnn_intent_classifier_forward.1} parent=5 // pred_check_branch
      %177 = sbr.rel (%p175) target = $region32
    $region31: #{cnn_intent_classifier_forward.1} parent=5 // pred_region
      // Predicated region
      $region33: #{cnn_intent_classifier_forward.1} parent=31 // pred_check
        %p178 = pneg %p31
      $region34: #{cnn_intent_classifier_forward.1} parent=31 // pred_check_branch
        %180 = sbr.rel (%p178) target = $region36
      $region35: #{cnn_intent_classifier_forward.1} parent=31 // pred_region
        %s181 = smul.u32 36, %s11
        %p182 = scmp.lt.s32.totalorder %s181, 71
        %s183 = scalar_select %p182, %s181, 71
        %s184 = smul.addr %s183, 8
        %s185 = scalar_lea.vmem %s0, %s184
        %s186 = smul.u32 36, %s11
      $region36: #{cnn_intent_classifier_forward.1} parent=31 // pred_fallthru
        _
    $region32: #{cnn_intent_classifier_forward.1} parent=5 // pred_fallthru
      _
    %p187 = scmp.le.s32.totalorder 1, %s11
    %p188 = scmp.lt.s32.totalorder %s11, 3
    %p189 = pnand %p187, %p188
    %p190 = pneg %p189
    // Predicated region
    $region37: #{cnn_intent_classifier_forward.1} parent=5 // pred_check
      _
    $region38: #{cnn_intent_classifier_forward.1} parent=5 // pred_check_branch
      %192 = sbr.rel (%p189) target = $region40
    $region39: #{cnn_intent_classifier_forward.1} parent=5 // pred_region
      %s193 = ssub.s32 %s11, 1
      %s194 = smul.u32 36, %s16
      %p195 = scmp.lt.s32.totalorder %s194, 71
      %s196 = scalar_select %p195, %s194, 71
      %s197 = smul.addr %s196, 8
      %s198 = scalar_lea.vmem %s0, %s197
      %p199 = pneg %p37
      %p200 = pneg %p34
      %p201 = pneg %p58
      %p202 = pneg %p55
      %p203 = pneg %p79
      %p204 = pneg %p76
      %p205 = pneg %p100
      %p206 = pneg %p97
      %p207 = pneg %p121
      %p208 = pneg %p118
      %p209 = pneg %p147
      %p210 = pneg %p144
      %s211 = smul.u32 2, %s16
      %p212 = scmp.lt.s32.totalorder %s211, 3
      %s213 = scalar_select %p212, %s211, 3
      %s214 = smul.addr %s213, 8
      %s215 = scalar_lea.vmem %s5, %s214
      %s216 = smul.u32 36, %s16
      %p217 = scmp.lt.s32.totalorder %s216, 71
      %s218 = scalar_select %p217, %s216, 71
      %s219 = smul.addr %s218, 8
      %s220 = scalar_lea.vmem %s0, %s219
      %s221 = smul.u32 36, %s16
      %s222 = smul.u32 2, %s16
      %p223 = scmp.lt.s32.totalorder %s222, 3
      %s224 = scalar_select %p223, %s222, 3
      %s225 = smul.addr %s224, 8
      %s226 = scalar_lea.vmem %s5, %s225
      %s227 = smul.u32 2, %s16
      %v229 = vld [vmem:[%s220] sm:$0xff]
      %v230 = vld [vmem:[%s220 + $0x8] sm:$0xff]
      %v231 = vld [vmem:[%s220 + $0x10] sm:$0xff]
      %v232 = vld [vmem:[%s220 + $0x18] sm:$0xff]
      %v233 = vld [vmem:[%s220 + $0x20] sm:$0xff]
      %v234 = vld [vmem:[%s220 + $0x28] sm:$0xff]
      %v235 = vld [vmem:[%s220 + $0x30] sm:$0xff]
      %v236 = vld [vmem:[%s220 + $0x38] sm:$0xff]
      %v237 = vld [vmem:[%s220 + $0x40] sm:$0xff]
      %v238 = vld [vmem:[%s220 + $0x48] sm:$0xff]
      %v239 = vld [vmem:[%s220 + $0x50] sm:$0xff]
      %v240 = vld [vmem:[%s220 + $0x58] sm:$0xff]
      %v241 = vld [vmem:[%s220 + $0x60] sm:$0xff]
      %v242 = vld [vmem:[%s220 + $0x68] sm:$0xff]
      %v243 = vld [vmem:[%s220 + $0x70] sm:$0xff]
      %v244 = vld [vmem:[%s220 + $0x78] sm:$0xff]
      %v245 = vld [vmem:[%s220 + $0x80] sm:$0xff]
      %v246 = vld [vmem:[%s220 + $0x88] sm:$0xff]
      %v247 = vld [vmem:[%s220 + $0x90] sm:$0xff]
      %v248 = vld [vmem:[%s220 + $0x98] sm:$0xff]
      %v249 = vld [vmem:[%s220 + $0xa0] sm:$0xff]
      %v250 = vld [vmem:[%s220 + $0xa8] sm:$0xff]
      %v251 = vld [vmem:[%s220 + $0xb0] sm:$0xff]
      %v252 = vld [vmem:[%s220 + $0xb8] sm:$0xff]
      %v253 = vld [vmem:[%s220 + $0xc0] sm:$0xff]
      %v254 = vld [vmem:[%s220 + $0xc8] sm:$0xff]
      %v255 = vld [vmem:[%s220 + $0xd0] sm:$0xff]
      %v256 = vld [vmem:[%s220 + $0xd8] sm:$0xff]
      %v257 = vld [vmem:[%s220 + $0xe0] sm:$0xff]
      %v258 = vld [vmem:[%s220 + $0xe8] sm:$0xff]
      %v259 = vld [vmem:[%s220 + $0xf0] sm:$0xff]
      %v260 = vld [vmem:[%s220 + $0xf8] sm:$0xff]
      %v261 = vld [vmem:[%s220 + $0x100] sm:$0xff]
      %v262 = vld [vmem:[%s220 + $0x108] sm:$0xff]
      %v263 = vld [vmem:[%s220 + $0x110] sm:$0xff]
      %v264 = vld [vmem:[%s220 + $0x118] sm:$0xff]
      %v265 = vlaneseq
      %v266 = vand.u32 %v265, 127
      %267 = vset.pattern.permute.xlu0 0
      %268 = vperm.xlu0 %267, %v229
      %v269 = vpop.permute.xlu0 %268
      %270 = vset.pattern.permute.xlu0 0
      %271 = vperm.xlu0 %270, %v230
      %v272 = vpop.permute.xlu0 %271
      %273 = vset.pattern.permute.xlu0 0
      %274 = vperm.xlu0 %273, %v231
      %v275 = vpop.permute.xlu0 %274
      %276 = vset.pattern.permute.xlu0 0
      %277 = vperm.xlu0 %276, %v232
      %v278 = vpop.permute.xlu0 %277
      %279 = vset.pattern.permute.xlu0 0
      %280 = vperm.xlu0 %279, %v233
      %v281 = vpop.permute.xlu0 %280
      %282 = vset.pattern.permute.xlu0 0
      %283 = vperm.xlu0 %282, %v234
      %v284 = vpop.permute.xlu0 %283
      %285 = vset.pattern.permute.xlu0 0
      %286 = vperm.xlu0 %285, %v235
      %v287 = vpop.permute.xlu0 %286
      %288 = vset.pattern.permute.xlu0 0
      %289 = vperm.xlu0 %288, %v236
      %v290 = vpop.permute.xlu0 %289
      %291 = vset.pattern.permute.xlu0 0
      %292 = vperm.xlu0 %291, %v237
      %v293 = vpop.permute.xlu0 %292
      %294 = vset.pattern.permute.xlu0 0
      %295 = vperm.xlu0 %294, %v238
      %v296 = vpop.permute.xlu0 %295
      %297 = vset.pattern.permute.xlu0 0
      %298 = vperm.xlu0 %297, %v239
      %v299 = vpop.permute.xlu0 %298
      %300 = vset.pattern.permute.xlu0 0
      %301 = vperm.xlu0 %300, %v240
      %v302 = vpop.permute.xlu0 %301
      %303 = vset.pattern.permute.xlu0 0
      %304 = vperm.xlu0 %303, %v241
      %v305 = vpop.permute.xlu0 %304
      %306 = vset.pattern.permute.xlu0 0
      %307 = vperm.xlu0 %306, %v242
      %v308 = vpop.permute.xlu0 %307
      %309 = vset.pattern.permute.xlu0 0
      %310 = vperm.xlu0 %309, %v243
      %v311 = vpop.permute.xlu0 %310
      %312 = vset.pattern.permute.xlu0 0
      %313 = vperm.xlu0 %312, %v244
      %v314 = vpop.permute.xlu0 %313
      %315 = vset.pattern.permute.xlu0 0
      %316 = vperm.xlu0 %315, %v245
      %v317 = vpop.permute.xlu0 %316
      %318 = vset.pattern.permute.xlu0 0
      %319 = vperm.xlu0 %318, %v246
      %v320 = vpop.permute.xlu0 %319
      %321 = vset.pattern.permute.xlu0 0
      %322 = vperm.xlu0 %321, %v247
      %v323 = vpop.permute.xlu0 %322
      %324 = vset.pattern.permute.xlu0 0
      %325 = vperm.xlu0 %324, %v248
      %v326 = vpop.permute.xlu0 %325
      %327 = vset.pattern.permute.xlu0 0
      %328 = vperm.xlu0 %327, %v249
      %v329 = vpop.permute.xlu0 %328
      %330 = vset.pattern.permute.xlu0 0
      %331 = vperm.xlu0 %330, %v250
      %v332 = vpop.permute.xlu0 %331
      %333 = vset.pattern.permute.xlu0 0
      %334 = vperm.xlu0 %333, %v251
      %v335 = vpop.permute.xlu0 %334
      %336 = vset.pattern.permute.xlu0 0
      %337 = vperm.xlu0 %336, %v252
      %v338 = vpop.permute.xlu0 %337
      %339 = vset.pattern.permute.xlu0 0
      %340 = vperm.xlu0 %339, %v253
      %v341 = vpop.permute.xlu0 %340
      %342 = vset.pattern.permute.xlu0 0
      %343 = vperm.xlu0 %342, %v254
      %v344 = vpop.permute.xlu0 %343
      %345 = vset.pattern.permute.xlu0 0
      %346 = vperm.xlu0 %345, %v255
      %v347 = vpop.permute.xlu0 %346
      %348 = vset.pattern.permute.xlu0 0
      %349 = vperm.xlu0 %348, %v256
      %v350 = vpop.permute.xlu0 %349
      %351 = vset.pattern.permute.xlu0 0
      %352 = vperm.xlu0 %351, %v257
      %v353 = vpop.permute.xlu0 %352
      %354 = vset.pattern.permute.xlu0 0
      %355 = vperm.xlu0 %354, %v258
      %v356 = vpop.permute.xlu0 %355
      %357 = vset.pattern.permute.xlu0 0
      %358 = vperm.xlu0 %357, %v259
      %v359 = vpop.permute.xlu0 %358
      %360 = vset.pattern.permute.xlu0 0
      %361 = vperm.xlu0 %360, %v260
      %v362 = vpop.permute.xlu0 %361
      %363 = vset.pattern.permute.xlu0 0
      %364 = vperm.xlu0 %363, %v261
      %v365 = vpop.permute.xlu0 %364
      %366 = vset.pattern.permute.xlu0 0
      %367 = vperm.xlu0 %366, %v262
      %v368 = vpop.permute.xlu0 %367
      %369 = vset.pattern.permute.xlu0 0
      %370 = vperm.xlu0 %369, %v263
      %v371 = vpop.permute.xlu0 %370
      %372 = vset.pattern.permute.xlu0 0
      %373 = vperm.xlu0 %372, %v264
      %v374 = vpop.permute.xlu0 %373
      %vm375 = vcmp.eq.s32.totalorder %v266, %v269
      %vm376 = vcmp.eq.s32.totalorder %v266, %v272
      %vm377 = vcmp.eq.s32.totalorder %v266, %v275
      %vm378 = vcmp.eq.s32.totalorder %v266, %v278
      %vm379 = vcmp.eq.s32.totalorder %v266, %v281
      %vm380 = vcmp.eq.s32.totalorder %v266, %v284
      %vm381 = vcmp.eq.s32.totalorder %v266, %v287
      %vm382 = vcmp.eq.s32.totalorder %v266, %v290
      %vm383 = vcmp.eq.s32.totalorder %v266, %v293
      %vm384 = vcmp.eq.s32.totalorder %v266, %v296
      %vm385 = vcmp.eq.s32.totalorder %v266, %v299
      %vm386 = vcmp.eq.s32.totalorder %v266, %v302
      %vm387 = vcmp.eq.s32.totalorder %v266, %v305
      %vm388 = vcmp.eq.s32.totalorder %v266, %v308
      %vm389 = vcmp.eq.s32.totalorder %v266, %v311
      %vm390 = vcmp.eq.s32.totalorder %v266, %v314
      %vm391 = vcmp.eq.s32.totalorder %v266, %v317
      %vm392 = vcmp.eq.s32.totalorder %v266, %v320
      %vm393 = vcmp.eq.s32.totalorder %v266, %v323
      %vm394 = vcmp.eq.s32.totalorder %v266, %v326
      %vm395 = vcmp.eq.s32.totalorder %v266, %v329
      %vm396 = vcmp.eq.s32.totalorder %v266, %v332
      %vm397 = vcmp.eq.s32.totalorder %v266, %v335
      %vm398 = vcmp.eq.s32.totalorder %v266, %v338
      %vm399 = vcmp.eq.s32.totalorder %v266, %v341
      %vm400 = vcmp.eq.s32.totalorder %v266, %v344
      %vm401 = vcmp.eq.s32.totalorder %v266, %v347
      %vm402 = vcmp.eq.s32.totalorder %v266, %v350
      %vm403 = vcmp.eq.s32.totalorder %v266, %v353
      %vm404 = vcmp.eq.s32.totalorder %v266, %v356
      %vm405 = vcmp.eq.s32.totalorder %v266, %v359
      %vm406 = vcmp.eq.s32.totalorder %v266, %v362
      %vm407 = vcmp.eq.s32.totalorder %v266, %v365
      %vm408 = vcmp.eq.s32.totalorder %v266, %v368
      %vm409 = vcmp.eq.s32.totalorder %v266, %v371
      %vm410 = vcmp.eq.s32.totalorder %v266, %v374
      %v411 = vsel %vm375, 1, 0
      %v412 = vsel %vm376, 1, 0
      %v413 = vsel %vm377, 1, 0
      %v414 = vsel %vm378, 1, 0
      %v415 = vsel %vm379, 1, 0
      %v416 = vsel %vm380, 1, 0
      %v417 = vsel %vm381, 1, 0
      %v418 = vsel %vm382, 1, 0
      %v419 = vsel %vm383, 1, 0
      %v420 = vsel %vm384, 1, 0
      %v421 = vsel %vm385, 1, 0
      %v422 = vsel %vm386, 1, 0
      %v423 = vsel %vm387, 1, 0
      %v424 = vsel %vm388, 1, 0
      %v425 = vsel %vm389, 1, 0
      %v426 = vsel %vm390, 1, 0
      %v427 = vsel %vm391, 1, 0
      %v428 = vsel %vm392, 1, 0
      %v429 = vsel %vm393, 1, 0
      %v430 = vsel %vm394, 1, 0
      %v431 = vsel %vm395, 1, 0
      %v432 = vsel %vm396, 1, 0
      %v433 = vsel %vm397, 1, 0
      %v434 = vsel %vm398, 1, 0
      %v435 = vsel %vm399, 1, 0
      %v436 = vsel %vm400, 1, 0
      %v437 = vsel %vm401, 1, 0
      %v438 = vsel %vm402, 1, 0
      %v439 = vsel %vm403, 1, 0
      %v440 = vsel %vm404, 1, 0
      %v441 = vsel %vm405, 1, 0
      %v442 = vsel %vm406, 1, 0
      %v443 = vsel %vm407, 1, 0
      %v444 = vsel %vm408, 1, 0
      %v445 = vsel %vm409, 1, 0
      %v446 = vsel %vm410, 1, 0
      %v447 = vcvt.s32.f32 %v411
      %v448 = vcvt.s32.f32 %v412
      %v449 = vcvt.s32.f32 %v413
      %v450 = vcvt.s32.f32 %v414
      %v451 = vcvt.s32.f32 %v415
      %v452 = vcvt.s32.f32 %v416
      %v453 = vcvt.s32.f32 %v417
      %v454 = vcvt.s32.f32 %v418
      %v455 = vcvt.s32.f32 %v419
      %v456 = vcvt.s32.f32 %v420
      %v457 = vcvt.s32.f32 %v421
      %v458 = vcvt.s32.f32 %v422
      %v459 = vcvt.s32.f32 %v423
      %v460 = vcvt.s32.f32 %v424
      %v461 = vcvt.s32.f32 %v425
      %v462 = vcvt.s32.f32 %v426
      %v463 = vcvt.s32.f32 %v427
      %v464 = vcvt.s32.f32 %v428
      %v465 = vcvt.s32.f32 %v429
      %v466 = vcvt.s32.f32 %v430
      %v467 = vcvt.s32.f32 %v431
      %v468 = vcvt.s32.f32 %v432
      %v469 = vcvt.s32.f32 %v433
      %v470 = vcvt.s32.f32 %v434
      %v471 = vcvt.s32.f32 %v435
      %v472 = vcvt.s32.f32 %v436
      %v473 = vcvt.s32.f32 %v437
      %v474 = vcvt.s32.f32 %v438
      %v475 = vcvt.s32.f32 %v439
      %v476 = vcvt.s32.f32 %v440
      %v477 = vcvt.s32.f32 %v441
      %v478 = vcvt.s32.f32 %v442
      %v479 = vcvt.s32.f32 %v443
      %v480 = vcvt.s32.f32 %v444
      %v481 = vcvt.s32.f32 %v445
      %v482 = vcvt.s32.f32 %v446
      %v483 = vpack.c.bf16 %v448, %v447
      %v484 = vpack.c.bf16 %v450, %v449
      %v485 = vpack.c.bf16 %v452, %v451
      %v486 = vpack.c.bf16 %v454, %v453
      %v487 = vpack.c.bf16 %v456, %v455
      %v488 = vpack.c.bf16 %v458, %v457
      %v489 = vpack.c.bf16 %v460, %v459
      %v490 = vpack.c.bf16 %v462, %v461
      %v491 = vpack.c.bf16 %v464, %v463
      %v492 = vpack.c.bf16 %v466, %v465
      %v493 = vpack.c.bf16 %v468, %v467
      %v494 = vpack.c.bf16 %v470, %v469
      %v495 = vpack.c.bf16 %v472, %v471
      %v496 = vpack.c.bf16 %v474, %v473
      %v497 = vpack.c.bf16 %v476, %v475
      %v498 = vpack.c.bf16 %v478, %v477
      %v499 = vpack.c.bf16 %v480, %v479
      %v500 = vpack.c.bf16 %v482, %v481
      %v501 = vld [vmem:[%s1] sm:$0xff]
      %v502 = vld [vmem:[%s1 + $0x8] sm:$0xf]
      %v503 = vld [vmem:[%s1 + $0xc] sm:$0xff]
      %v504 = vld [vmem:[%s1 + $0x14] sm:$0xf]
      %v505 = vld [vmem:[%s1 + $0x18] sm:$0xff]
      %v506 = vld [vmem:[%s1 + $0x20] sm:$0xf]
      %v507 = vld [vmem:[%s1 + $0x24] sm:$0xff]
      %v508 = vld [vmem:[%s1 + $0x2c] sm:$0xf]
      %v509 = vld [vmem:[%s1 + $0x30] sm:$0xff]
      %v510 = vld [vmem:[%s1 + $0x38] sm:$0xf]
      %v511 = vld [vmem:[%s1 + $0x3c] sm:$0xff]
      %v512 = vld [vmem:[%s1 + $0x44] sm:$0xf]
      %v513 = vld [vmem:[%s1 + $0x48] sm:$0xff]
      %v514 = vld [vmem:[%s1 + $0x50] sm:$0xf]
      %v515 = vld [vmem:[%s1 + $0x54] sm:$0xff]
      %v516 = vld [vmem:[%s1 + $0x5c] sm:$0xf]
      %v517 = vld [vmem:[%s1 + $0x60] sm:$0xff]
      %v518 = vld [vmem:[%s1 + $0x68] sm:$0xf]
      %v519 = vld [vmem:[%s1 + $0x6c] sm:$0xff]
      %v520 = vld [vmem:[%s1 + $0x74] sm:$0xf]
      %v521 = vld [vmem:[%s1 + $0x78] sm:$0xff]
      %v522 = vld [vmem:[%s1 + $0x80] sm:$0xf]
      %v523 = vld [vmem:[%s1 + $0x84] sm:$0xff]
      %v524 = vld [vmem:[%s1 + $0x8c] sm:$0xf]
      %v525 = vld [vmem:[%s1 + $0x90] sm:$0xff]
      %v526 = vld [vmem:[%s1 + $0x98] sm:$0xf]
      %v527 = vld [vmem:[%s1 + $0x9c] sm:$0xff]
      %v528 = vld [vmem:[%s1 + $0xa4] sm:$0xf]
      %v529 = vld [vmem:[%s1 + $0xa8] sm:$0xff]
      %v530 = vld [vmem:[%s1 + $0xb0] sm:$0xf]
      %v531 = vld [vmem:[%s1 + $0xb4] sm:$0xff]
      %v532 = vld [vmem:[%s1 + $0xbc] sm:$0xf]
      %v565 = vunpack.c.l.b16 %v501
      %v566 = vunpack.c.h.b16 %v501
      %v567 = vunpack.c.l.b16 %v502
      %v568 = vunpack.c.l.b16 %v503
      %v569 = vunpack.c.h.b16 %v503
      %v570 = vunpack.c.l.b16 %v504
      %v571 = vunpack.c.l.b16 %v505
      %v572 = vunpack.c.h.b16 %v505
      %v573 = vunpack.c.l.b16 %v506
      %v574 = vunpack.c.l.b16 %v507
      %v575 = vunpack.c.h.b16 %v507
      %v576 = vunpack.c.l.b16 %v508
      %v577 = vunpack.c.l.b16 %v509
      %v578 = vunpack.c.h.b16 %v509
      %v579 = vunpack.c.l.b16 %v510
      %v580 = vunpack.c.l.b16 %v511
      %v581 = vunpack.c.h.b16 %v511
      %v582 = vunpack.c.l.b16 %v512
      %v583 = vunpack.c.l.b16 %v513
      %v584 = vunpack.c.h.b16 %v513
      %v585 = vunpack.c.l.b16 %v514
      %v586 = vunpack.c.l.b16 %v515
      %v587 = vunpack.c.h.b16 %v515
      %v588 = vunpack.c.l.b16 %v516
      %v589 = vunpack.c.l.b16 %v517
      %v590 = vunpack.c.h.b16 %v517
      %v591 = vunpack.c.l.b16 %v518
      %v592 = vunpack.c.l.b16 %v519
      %v593 = vunpack.c.h.b16 %v519
      %v594 = vunpack.c.l.b16 %v520
      %v595 = vunpack.c.l.b16 %v521
      %v596 = vunpack.c.h.b16 %v521
      %v597 = vunpack.c.l.b16 %v522
      %v598 = vunpack.c.l.b16 %v523
      %v599 = vunpack.c.h.b16 %v523
      %v600 = vunpack.c.l.b16 %v524
      %v601 = vunpack.c.l.b16 %v525
      %v602 = vunpack.c.h.b16 %v525
      %v603 = vunpack.c.l.b16 %v526
      %v604 = vunpack.c.l.b16 %v527
      %v605 = vunpack.c.h.b16 %v527
      %v606 = vunpack.c.l.b16 %v528
      %v607 = vunpack.c.l.b16 %v529
      %v608 = vunpack.c.h.b16 %v529
      %v609 = vunpack.c.l.b16 %v530
      %v610 = vunpack.c.l.b16 %v531
      %v611 = vunpack.c.h.b16 %v531
      %v612 = vunpack.c.l.b16 %v532
      %v613 = vpack.c.b16 %v568, %v565
      %v614 = vpack.c.b16 %v569, %v566
      %v615 = vpack.c.b16 %v570, %v567
      %v616 = vpack.c.b16 %v574, %v571
      %v617 = vpack.c.b16 %v575, %v572
      %v618 = vpack.c.b16 %v576, %v573
      %v619 = vpack.c.b16 %v580, %v577
      %v620 = vpack.c.b16 %v581, %v578
      %v621 = vpack.c.b16 %v582, %v579
      %v622 = vpack.c.b16 %v586, %v583
      %v623 = vpack.c.b16 %v587, %v584
      %v624 = vpack.c.b16 %v588, %v585
      %v625 = vpack.c.b16 %v592, %v589
      %v626 = vpack.c.b16 %v593, %v590
      %v627 = vpack.c.b16 %v594, %v591
      %v628 = vpack.c.b16 %v598, %v595
      %v629 = vpack.c.b16 %v599, %v596
      %v630 = vpack.c.b16 %v600, %v597
      %v631 = vpack.c.b16 %v604, %v601
      %v632 = vpack.c.b16 %v605, %v602
      %v633 = vpack.c.b16 %v606, %v603
      %v634 = vpack.c.b16 %v610, %v607
      %v635 = vpack.c.b16 %v611, %v608
      %v636 = vpack.c.b16 %v612, %v609
      %661 = vmatprep.subr.bf16.mxu0 %v614
      %662 = vmatpush1.bf16.msra.mxu0 %v613
      %663 = vmatprep.subr.bf16.mxu0 %v617
      %664 = vmatpush1.bf16.msra.mxu0 %v616
      %665 = vmatprep.subr.bf16.mxu0 %v620
      %666 = vmatpush1.bf16.msra.mxu0 %v619
      %667 = vmatprep.subr.bf16.mxu0 %v623
      %668 = vmatpush1.bf16.msra.mxu0 %v622
      %669 = vmatprep.subr.bf16.mxu0 %v626
      %670 = vmatpush1.bf16.msra.mxu0 %v625
      %671 = vmatprep.subr.bf16.mxu0 %v629
      %672 = vmatpush1.bf16.msra.mxu0 %v628
      %673 = vmatprep.subr.bf16.mxu0 %v632
      %674 = vmatpush1.bf16.msra.mxu0 %v631
      %675 = vmatprep.subr.bf16.mxu0 %v635
      %676 = vmatpush1.bf16.msra.mxu0 %v634
      %677 = vmatprep.subr.bf16.mxu0 0
      %678 = vmatpush1.bf16.msra.mxu0 0
      %679 = vmatprep.subr.bf16.mxu0 0
      %680 = vmatpush1.bf16.msra.mxu0 0
      %681 = vmatprep.subr.bf16.mxu0 0
      %682 = vmatpush1.bf16.msra.mxu0 0
      %683 = vmatprep.subr.bf16.mxu0 0
      %684 = vmatpush1.bf16.msra.mxu0 0
      %685 = vmatprep.subr.bf16.mxu0 0
      %686 = vmatpush1.bf16.msra.mxu0 0
      %687 = vmatprep.subr.bf16.mxu0 0
      %688 = vmatpush1.bf16.msra.mxu0 0
      %689 = vmatprep.subr.bf16.mxu0 0
      %690 = vmatpush1.bf16.msra.mxu0 0
      %691 = vmatprep.subr.bf16.mxu0 0
      %692 = vmatpush1.bf16.msra.mxu0 0
      %693 = vmatprep.mubr.bf16.mxu0 0
      %694 = vmatmul.mubr.bf16.gmra.mrb[0].mxu0 %v483
      %v695 = vpop.f32.mrb[0].mxu0
      %v696 = vadd.f32 0.0, %v695
      %v697 = vpop.f32.mrb[0].mxu0
      %v698 = vpop.f32.mrb[0].mxu0
      %v699 = vadd.f32 0.0, %v698
      %v700 = vpop.f32.mrb[0].mxu0
      %701 = vmatprep.mubr.bf16.mxu0 0
      %702 = vmatmul.mubr.bf16.gmra.mrb[0].mxu0 %v484
      %v703 = vpop.f32.mrb[0].mxu0
      %v704 = vadd.f32 0.0, %v703
      %v705 = vpop.f32.mrb[0].mxu0
      %v706 = vadd.f32 0.0, %v705
      %v707 = vpop.f32.mrb[0].mxu0
      %v708 = vadd.f32 0.0, %v707
      %v709 = vpop.f32.mrb[0].mxu0
      %v710 = vadd.f32 0.0, %v709
      %711 = vmatprep.mubr.bf16.mxu0 0
      %712 = vmatmul.mubr.bf16.gmra.mrb[0].mxu0 %v485
      %v713 = vpop.f32.mrb[0].mxu0
      %v714 = vadd.f32 0.0, %v713
      %v715 = vpop.f32.mrb[0].mxu0
      %v716 = vadd.f32 0.0, %v715
      %v717 = vpop.f32.mrb[0].mxu0
      %v718 = vadd.f32 0.0, %v717
      %v719 = vpop.f32.mrb[0].mxu0
      %v720 = vadd.f32 0.0, %v719
      %721 = vmatprep.mubr.bf16.mxu0 0
      %722 = vmatmul.mubr.bf16.gmra.mrb[0].mxu0 %v486
      %v723 = vpop.f32.mrb[0].mxu0
      %v724 = vadd.f32 0.0, %v723
      %v725 = vpop.f32.mrb[0].mxu0
      %v726 = vadd.f32 0.0, %v725
      %v727 = vpop.f32.mrb[0].mxu0
      %v728 = vadd.f32 0.0, %v727
      %v729 = vpop.f32.mrb[0].mxu0
      %v730 = vadd.f32 0.0, %v729
      %731 = vmatprep.mubr.bf16.mxu0 0
      %732 = vmatmul.mubr.bf16.gmra.mrb[0].mxu0 %v487
      %v733 = vpop.f32.mrb[0].mxu0
      %v734 = vadd.f32 0.0, %v733
      %v735 = vpop.f32.mrb[0].mxu0
      %v736 = vadd.f32 0.0, %v735
      %v737 = vpop.f32.mrb[0].mxu0
      %v738 = vadd.f32 0.0, %v737
      %v739 = vpop.f32.mrb[0].mxu0
      %v740 = vadd.f32 0.0, %v739
      %741 = vmatprep.mubr.bf16.mxu0 0
      %742 = vmatmul.mubr.bf16.gmra.mrb[0].mxu0 %v488
      %v743 = vpop.f32.mrb[0].mxu0
      %v744 = vadd.f32 0.0, %v743
      %v745 = vpop.f32.mrb[0].mxu0
      %v746 = vadd.f32 0.0, %v745
      %v747 = vpop.f32.mrb[0].mxu0
      %v748 = vadd.f32 0.0, %v747
      %v749 = vpop.f32.mrb[0].mxu0
      %v750 = vadd.f32 0.0, %v749
      %751 = vmatprep.mubr.bf16.mxu0 0
      %752 = vmatmul.mubr.bf16.gmra.mrb[0].mxu0 %v489
      %v753 = vpop.f32.mrb[0].mxu0
      %v754 = vadd.f32 0.0, %v753
      %v755 = vpop.f32.mrb[0].mxu0
      %v756 = vadd.f32 0.0, %v755
      %v757 = vpop.f32.mrb[0].mxu0
      %v758 = vadd.f32 0.0, %v757
      %v759 = vpop.f32.mrb[0].mxu0
      %v760 = vadd.f32 0.0, %v759
      %761 = vmatprep.mubr.bf16.mxu0 0
      %762 = vmatmul.mubr.bf16.gmra.mrb[0].mxu0 %v490
      %v763 = vpop.f32.mrb[0].mxu0
      %v764 = vadd.f32 0.0, %v763
      %v765 = vpop.f32.mrb[0].mxu0
      %v766 = vadd.f32 0.0, %v765
      %v767 = vpop.f32.mrb[0].mxu0
      %v768 = vadd.f32 0.0, %v767
      %v769 = vpop.f32.mrb[0].mxu0
      %v770 = vadd.f32 0.0, %v769
      %771 = vmatprep.mubr.bf16.mxu0 0
      %772 = vmatmul.mubr.bf16.gmra.mrb[0].mxu0 %v491
      %v773 = vpop.f32.mrb[0].mxu0
      %v774 = vadd.f32 0.0, %v773
      %v775 = vpop.f32.mrb[0].mxu0
      %v776 = vadd.f32 0.0, %v775
      %v777 = vpop.f32.mrb[0].mxu0
      %v778 = vadd.f32 0.0, %v777
      %v779 = vpop.f32.mrb[0].mxu0
      %v780 = vadd.f32 0.0, %v779
      %781 = vmatprep.mubr.bf16.mxu0 0
      %782 = vmatmul.mubr.bf16.gmra.mrb[0].mxu0 %v492
      %v783 = vpop.f32.mrb[0].mxu0
      %v784 = vadd.f32 0.0, %v783
      %v785 = vpop.f32.mrb[0].mxu0
      %v786 = vadd.f32 0.0, %v785
      %v787 = vpop.f32.mrb[0].mxu0
      %v788 = vadd.f32 0.0, %v787
      %v789 = vpop.f32.mrb[0].mxu0
      %v790 = vadd.f32 0.0, %v789
      %791 = vmatprep.mubr.bf16.mxu0 0
      %792 = vmatmul.mubr.bf16.gmra.mrb[0].mxu0 %v493
      %v793 = vpop.f32.mrb[0].mxu0
      %v794 = vadd.f32 0.0, %v793
      %v795 = vpop.f32.mrb[0].mxu0
      %v796 = vadd.f32 0.0, %v795
      %v797 = vpop.f32.mrb[0].mxu0
      %v798 = vadd.f32 0.0, %v797
      %v799 = vpop.f32.mrb[0].mxu0
      %v800 = vadd.f32 0.0, %v799
      %801 = vmatprep.mubr.bf16.mxu0 0
      %802 = vmatmul.mubr.bf16.gmra.mrb[0].mxu0 %v494
      %v803 = vpop.f32.mrb[0].mxu0
      %v804 = vadd.f32 0.0, %v803
      %v805 = vpop.f32.mrb[0].mxu0
      %v806 = vadd.f32 0.0, %v805
      %v807 = vpop.f32.mrb[0].mxu0
      %v808 = vadd.f32 0.0, %v807
      %v809 = vpop.f32.mrb[0].mxu0
      %v810 = vadd.f32 0.0, %v809
      %811 = vmatprep.mubr.bf16.mxu0 0
      %812 = vmatmul.mubr.bf16.gmra.mrb[0].mxu0 %v495
      %v813 = vpop.f32.mrb[0].mxu0
      %v814 = vadd.f32 0.0, %v813
      %v815 = vpop.f32.mrb[0].mxu0
      %v816 = vadd.f32 0.0, %v815
      %v817 = vpop.f32.mrb[0].mxu0
      %v818 = vadd.f32 0.0, %v817
      %v819 = vpop.f32.mrb[0].mxu0
      %v820 = vadd.f32 0.0, %v819
      %821 = vmatprep.mubr.bf16.mxu0 0
      %822 = vmatmul.mubr.bf16.gmra.mrb[0].mxu0 %v496
      %v823 = vpop.f32.mrb[0].mxu0
      %v824 = vadd.f32 0.0, %v823
      %v825 = vpop.f32.mrb[0].mxu0
      %v826 = vadd.f32 0.0, %v825
      %v827 = vpop.f32.mrb[0].mxu0
      %v828 = vadd.f32 0.0, %v827
      %v829 = vpop.f32.mrb[0].mxu0
      %v830 = vadd.f32 0.0, %v829
      %831 = vmatprep.mubr.bf16.mxu0 0
      %832 = vmatmul.mubr.bf16.gmra.mrb[0].mxu0 %v497
      %v833 = vpop.f32.mrb[0].mxu0
      %v834 = vadd.f32 0.0, %v833
      %v835 = vpop.f32.mrb[0].mxu0
      %v836 = vadd.f32 0.0, %v835
      %v837 = vpop.f32.mrb[0].mxu0
      %v838 = vadd.f32 0.0, %v837
      %v839 = vpop.f32.mrb[0].mxu0
      %v840 = vadd.f32 0.0, %v839
      %841 = vmatprep.mubr.bf16.mxu0 0
      %842 = vmatmul.mubr.bf16.gmra.mrb[0].mxu0 %v498
      %v843 = vpop.f32.mrb[0].mxu0
      %v844 = vadd.f32 0.0, %v843
      %v845 = vpop.f32.mrb[0].mxu0
      %v846 = vadd.f32 0.0, %v845
      %v847 = vpop.f32.mrb[0].mxu0
      %v848 = vadd.f32 0.0, %v847
      %v849 = vpop.f32.mrb[0].mxu0
      %v850 = vadd.f32 0.0, %v849
      %851 = vmatprep.mubr.bf16.mxu0 0
      %852 = vmatmul.mubr.bf16.gmra.mrb[0].mxu0 %v499
      %v853 = vpop.f32.mrb[0].mxu0
      %v854 = vpop.f32.mrb[0].mxu0
      %v855 = vadd.f32 0.0, %v854
      %v856 = vpop.f32.mrb[0].mxu0
      %v857 = vpop.f32.mrb[0].mxu0
      %v858 = vadd.f32 0.0, %v857
      %859 = vmatprep.mubr.bf16.mxu0 0
      %860 = vmatmul.mubr.bf16.gmra.mrb[0].mxu0 %v500
      %v861 = vpop.f32.mrb[0].mxu0
      %v862 = vpop.f32.mrb[0].mxu0
      %v863 = vpop.f32.mrb[0].mxu0
      %v864 = vpop.f32.mrb[0].mxu0
      %865 = vdwg.mxu0
      %866 = vmatprep.subr.bf16.mxu0 0
      %867 = vmatpush1.bf16.msra.mxu0 %v615
      %868 = vmatprep.subr.bf16.mxu0 0
      %869 = vmatpush1.bf16.msra.mxu0 %v618
      %870 = vmatprep.subr.bf16.mxu0 0
      %871 = vmatpush1.bf16.msra.mxu0 %v621
      %872 = vmatprep.subr.bf16.mxu0 0
      %873 = vmatpush1.bf16.msra.mxu0 %v624
      %874 = vmatprep.subr.bf16.mxu0 0
      %875 = vmatpush1.bf16.msra.mxu0 %v627
      %876 = vmatprep.subr.bf16.mxu0 0
      %877 = vmatpush1.bf16.msra.mxu0 %v630
      %878 = vmatprep.subr.bf16.mxu0 0
      %879 = vmatpush1.bf16.msra.mxu0 %v633
      %880 = vmatprep.subr.bf16.mxu0 0
      %881 = vmatpush1.bf16.msra.mxu0 %v636
      %882 = vmatprep.subr.bf16.mxu0 0
      %883 = vmatpush1.bf16.msra.mxu0 0
      %884 = vmatprep.subr.bf16.mxu0 0
      %885 = vmatpush1.bf16.msra.mxu0 0
      %886 = vmatprep.subr.bf16.mxu0 0
      %887 = vmatpush1.bf16.msra.mxu0 0
      %888 = vmatprep.subr.bf16.mxu0 0
      %889 = vmatpush1.bf16.msra.mxu0 0
      %890 = vmatprep.subr.bf16.mxu0 0
      %891 = vmatpush1.bf16.msra.mxu0 0
      %892 = vmatprep.subr.bf16.mxu0 0
      %893 = vmatpush1.bf16.msra.mxu0 0
      %894 = vmatprep.subr.bf16.mxu0 0
      %895 = vmatpush1.bf16.msra.mxu0 0
      %896 = vmatprep.subr.bf16.mxu0 0
      %897 = vmatpush1.bf16.msra.mxu0 0
      %898 = vmatprep.mubr.bf16.mxu0 0
      %899 = vmatmul.mubr.bf16.gmra.mrb[0].mxu0 %v483
      %v900 = vpop.f32.mrb[0].mxu0
      %v901 = vpop.f32.mrb[0].mxu0
      %v902 = vpop.f32.mrb[0].mxu0
      %v903 = vpop.f32.mrb[0].mxu0
      %904 = vmatprep.mubr.bf16.mxu0 0
      %905 = vmatmul.mubr.bf16.gmra.mrb[0].mxu0 %v484
      %v906 = vpop.f32.mrb[0].mxu0
      %v907 = vpop.f32.mrb[0].mxu0
      %v908 = vpop.f32.mrb[0].mxu0
      %v909 = vpop.f32.mrb[0].mxu0
      %910 = vmatprep.mubr.bf16.mxu0 0
      %911 = vmatmul.mubr.bf16.gmra.mrb[0].mxu0 %v485
      %v912 = vpop.f32.mrb[0].mxu0
      %v913 = vadd.f32 0.0, %v912
      %v914 = vpop.f32.mrb[0].mxu0
      %v915 = vpop.f32.mrb[0].mxu0
      %v916 = vadd.f32 0.0, %v915
      %v917 = vpop.f32.mrb[0].mxu0
      %918 = vmatprep.mubr.bf16.mxu0 0
      %919 = vmatmul.mubr.bf16.gmra.mrb[0].mxu0 %v486
      %v920 = vpop.f32.mrb[0].mxu0
      %v921 = vadd.f32 0.0, %v920
      %v922 = vpop.f32.mrb[0].mxu0
      %v923 = vpop.f32.mrb[0].mxu0
      %v924 = vadd.f32 0.0, %v923
      %v925 = vpop.f32.mrb[0].mxu0
      %926 = vmatprep.mubr.bf16.mxu0 0
      %927 = vmatmul.mubr.bf16.gmra.mrb[0].mxu0 %v487
      %v928 = vpop.f32.mrb[0].mxu0
      %v929 = vadd.f32 0.0, %v928
      %v930 = vpop.f32.mrb[0].mxu0
      %v931 = vpop.f32.mrb[0].mxu0
      %v932 = vadd.f32 0.0, %v931
      %v933 = vpop.f32.mrb[0].mxu0
      %934 = vmatprep.mubr.bf16.mxu0 0
      %935 = vmatmul.mubr.bf16.gmra.mrb[0].mxu0 %v488
      %v936 = vpop.f32.mrb[0].mxu0
      %v937 = vadd.f32 0.0, %v936
      %v938 = vpop.f32.mrb[0].mxu0
      %v939 = vpop.f32.mrb[0].mxu0
      %v940 = vadd.f32 0.0, %v939
      %v941 = vpop.f32.mrb[0].mxu0
      %942 = vmatprep.mubr.bf16.mxu0 0
      %943 = vmatmul.mubr.bf16.gmra.mrb[0].mxu0 %v489
      %v944 = vpop.f32.mrb[0].mxu0
      %v945 = vadd.f32 0.0, %v944
      %v946 = vpop.f32.mrb[0].mxu0
      %v947 = vpop.f32.mrb[0].mxu0
      %v948 = vadd.f32 0.0, %v947
      %v949 = vpop.f32.mrb[0].mxu0
      %950 = vmatprep.mubr.bf16.mxu0 0
      %951 = vmatmul.mubr.bf16.gmra.mrb[0].mxu0 %v490
      %v952 = vpop.f32.mrb[0].mxu0
      %v953 = vadd.f32 0.0, %v952
      %v954 = vpop.f32.mrb[0].mxu0
      %v955 = vpop.f32.mrb[0].mxu0
      %v956 = vadd.f32 0.0, %v955
      %v957 = vpop.f32.mrb[0].mxu0
      %958 = vmatprep.mubr.bf16.mxu0 0
      %959 = vmatmul.mubr.bf16.gmra.mrb[0].mxu0 %v491
      %v960 = vpop.f32.mrb[0].mxu0
      %v961 = vadd.f32 0.0, %v960
      %v962 = vpop.f32.mrb[0].mxu0
      %v963 = vpop.f32.mrb[0].mxu0
      %v964 = vadd.f32 0.0, %v963
      %v965 = vpop.f32.mrb[0].mxu0
      %966 = vmatprep.mubr.bf16.mxu0 0
      %967 = vmatmul.mubr.bf16.gmra.mrb[0].mxu0 %v492
      %v968 = vpop.f32.mrb[0].mxu0
      %v969 = vadd.f32 0.0, %v968
      %v970 = vpop.f32.mrb[0].mxu0
      %v971 = vpop.f32.mrb[0].mxu0
      %v972 = vadd.f32 0.0, %v971
      %v973 = vpop.f32.mrb[0].mxu0
      %974 = vmatprep.mubr.bf16.mxu0 0
      %975 = vmatmul.mubr.bf16.gmra.mrb[0].mxu0 %v493
      %v976 = vpop.f32.mrb[0].mxu0
      %v977 = vadd.f32 0.0, %v976
      %v978 = vpop.f32.mrb[0].mxu0
      %v979 = vpop.f32.mrb[0].mxu0
      %v980 = vadd.f32 0.0, %v979
      %v981 = vpop.f32.mrb[0].mxu0
      %982 = vmatprep.mubr.bf16.mxu0 0
      %983 = vmatmul.mubr.bf16.gmra.mrb[0].mxu0 %v494
      %v984 = vpop.f32.mrb[0].mxu0
      %v985 = vadd.f32 0.0, %v984
      %v986 = vpop.f32.mrb[0].mxu0
      %v987 = vpop.f32.mrb[0].mxu0
      %v988 = vadd.f32 0.0, %v987
      %v989 = vpop.f32.mrb[0].mxu0
      %990 = vmatprep.mubr.bf16.mxu0 0
      %991 = vmatmul.mubr.bf16.gmra.mrb[0].mxu0 %v495
      %v992 = vpop.f32.mrb[0].mxu0
      %v993 = vadd.f32 0.0, %v992
      %v994 = vpop.f32.mrb[0].mxu0
      %v995 = vpop.f32.mrb[0].mxu0
      %v996 = vadd.f32 0.0, %v995
      %v997 = vpop.f32.mrb[0].mxu0
      %998 = vmatprep.mubr.bf16.mxu0 0
      %999 = vmatmul.mubr.bf16.gmra.mrb[0].mxu0 %v496
      %v1000 = vpop.f32.mrb[0].mxu0
      %v1001 = vadd.f32 0.0, %v1000
      %v1002 = vpop.f32.mrb[0].mxu0
      %v1003 = vpop.f32.mrb[0].mxu0
      %v1004 = vadd.f32 0.0, %v1003
      %v1005 = vpop.f32.mrb[0].mxu0
      %1006 = vmatprep.mubr.bf16.mxu0 0
      %1007 = vmatmul.mubr.bf16.gmra.mrb[0].mxu0 %v497
      %v1008 = vpop.f32.mrb[0].mxu0
      %v1009 = vadd.f32 0.0, %v1008
      %v1010 = vpop.f32.mrb[0].mxu0
      %v1011 = vpop.f32.mrb[0].mxu0
      %v1012 = vadd.f32 0.0, %v1011
      %v1013 = vpop.f32.mrb[0].mxu0
      %1014 = vmatprep.mubr.bf16.mxu0 0
      %1015 = vmatmul.mubr.bf16.gmra.mrb[0].mxu0 %v498
      %v1016 = vpop.f32.mrb[0].mxu0
      %v1017 = vadd.f32 0.0, %v1016
      %v1018 = vpop.f32.mrb[0].mxu0
      %v1019 = vpop.f32.mrb[0].mxu0
      %v1020 = vadd.f32 0.0, %v1019
      %v1021 = vpop.f32.mrb[0].mxu0
      %1022 = vmatprep.mubr.bf16.mxu0 0
      %1023 = vmatmul.mubr.bf16.gmra.mrb[0].mxu0 %v499
      %v1024 = vpop.f32.mrb[0].mxu0
      %v1025 = vadd.f32 0.0, %v1024
      %v1026 = vpop.f32.mrb[0].mxu0
      %v1027 = vpop.f32.mrb[0].mxu0
      %v1028 = vadd.f32 0.0, %v1027
      %v1029 = vpop.f32.mrb[0].mxu0
      %1030 = vmatprep.mubr.bf16.mxu0 0
      %1031 = vmatmul.mubr.bf16.gmra.mrb[0].mxu0 %v500
      %v1032 = vpop.f32.mrb[0].mxu0
      %v1033 = vadd.f32 0.0, %v1032
      %v1034 = vpop.f32.mrb[0].mxu0
      %v1035 = vpop.f32.mrb[0].mxu0
      %v1036 = vadd.f32 0.0, %v1035
      %v1037 = vpop.f32.mrb[0].mxu0
      %1038 = vdwg.mxu0
      %v1039 = vadd.f32 %v696, %v706
      %v1040 = vadd.f32 %v699, %v710
      %v1041 = vadd.f32 %v704, %v716
      %v1042 = vadd.f32 %v708, %v720
      %v1043 = vadd.f32 %v714, %v726
      %v1044 = vadd.f32 %v718, %v730
      %v1045 = vadd.f32 %v724, %v736
      %v1046 = vadd.f32 %v728, %v740
      %v1047 = vadd.f32 %v734, %v746
      %v1048 = vadd.f32 %v738, %v750
      %v1049 = vadd.f32 %v744, %v756
      %v1050 = vadd.f32 %v748, %v760
      %v1051 = vadd.f32 %v754, %v766
      %v1052 = vadd.f32 %v758, %v770
      %v1053 = vadd.f32 %v764, %v776
      %v1054 = vadd.f32 %v768, %v780
      %v1055 = vadd.f32 %v774, %v786
      %v1056 = vadd.f32 %v778, %v790
      %v1057 = vadd.f32 %v784, %v796
      %v1058 = vadd.f32 %v788, %v800
      %v1059 = vadd.f32 %v794, %v806
      %v1060 = vadd.f32 %v798, %v810
      %v1061 = vadd.f32 %v804, %v816
      %v1062 = vadd.f32 %v808, %v820
      %v1063 = vadd.f32 %v814, %v826
      %v1064 = vadd.f32 %v818, %v830
      %v1065 = vadd.f32 %v824, %v836
      %v1066 = vadd.f32 %v828, %v840
      %v1067 = vadd.f32 %v834, %v846
      %v1068 = vadd.f32 %v838, %v850
      %v1069 = vadd.f32 %v844, %v855
      %v1070 = vadd.f32 %v848, %v858
      %v1071 = vadd.f32 %v1039, %v913
      %v1072 = vadd.f32 %v1040, %v916
      %v1073 = vadd.f32 %v1041, %v921
      %v1074 = vadd.f32 %v1042, %v924
      %v1075 = vadd.f32 %v1043, %v929
      %v1076 = vadd.f32 %v1044, %v932
      %v1077 = vadd.f32 %v1045, %v937
      %v1078 = vadd.f32 %v1046, %v940
      %v1079 = vadd.f32 %v1047, %v945
      %v1080 = vadd.f32 %v1048, %v948
      %v1081 = vadd.f32 %v1049, %v953
      %v1082 = vadd.f32 %v1050, %v956
      %v1083 = vadd.f32 %v1051, %v961
      %v1084 = vadd.f32 %v1052, %v964
      %v1085 = vadd.f32 %v1053, %v969
      %v1086 = vadd.f32 %v1054, %v972
      %v1087 = vadd.f32 %v1055, %v977
      %v1088 = vadd.f32 %v1056, %v980
      %v1089 = vadd.f32 %v1057, %v985
      %v1090 = vadd.f32 %v1058, %v988
      %v1091 = vadd.f32 %v1059, %v993
      %v1092 = vadd.f32 %v1060, %v996
      %v1093 = vadd.f32 %v1061, %v1001
      %v1094 = vadd.f32 %v1062, %v1004
      %v1095 = vadd.f32 %v1063, %v1009
      %v1096 = vadd.f32 %v1064, %v1012
      %v1097 = vadd.f32 %v1065, %v1017
      %v1098 = vadd.f32 %v1066, %v1020
      %v1099 = vadd.f32 %v1067, %v1025
      %v1100 = vadd.f32 %v1068, %v1028
      %v1101 = vadd.f32 %v1069, %v1033
      %v1102 = vadd.f32 %v1070, %v1036
      %v1103 = vld [vmem:[%s2] sm:$0x1]
      %v1105 = vlaneseq
      %v1106 = vshrl.u32 %v1105, 7
      %v1107 = vsub.s32 0, %v1106
      %v1108 = vrot.slane %v1103, %v1107
      %v1110 = vadd.f32 %v1071, %v1108
      %v1111 = vadd.f32 %v1072, %v1108
      %v1112 = vadd.f32 %v1073, %v1108
      %v1113 = vadd.f32 %v1074, %v1108
      %v1114 = vadd.f32 %v1075, %v1108
      %v1115 = vadd.f32 %v1076, %v1108
      %v1116 = vadd.f32 %v1077, %v1108
      %v1117 = vadd.f32 %v1078, %v1108
      %v1118 = vadd.f32 %v1079, %v1108
      %v1119 = vadd.f32 %v1080, %v1108
      %v1120 = vadd.f32 %v1081, %v1108
      %v1121 = vadd.f32 %v1082, %v1108
      %v1122 = vadd.f32 %v1083, %v1108
      %v1123 = vadd.f32 %v1084, %v1108
      %v1124 = vadd.f32 %v1085, %v1108
      %v1125 = vadd.f32 %v1086, %v1108
      %v1126 = vadd.f32 %v1087, %v1108
      %v1127 = vadd.f32 %v1088, %v1108
      %v1128 = vadd.f32 %v1089, %v1108
      %v1129 = vadd.f32 %v1090, %v1108
      %v1130 = vadd.f32 %v1091, %v1108
      %v1131 = vadd.f32 %v1092, %v1108
      %v1132 = vadd.f32 %v1093, %v1108
      %v1133 = vadd.f32 %v1094, %v1108
      %v1134 = vadd.f32 %v1095, %v1108
      %v1135 = vadd.f32 %v1096, %v1108
      %v1136 = vadd.f32 %v1097, %v1108
      %v1137 = vadd.f32 %v1098, %v1108
      %v1138 = vadd.f32 %v1099, %v1108
      %v1139 = vadd.f32 %v1100, %v1108
      %v1140 = vadd.f32 %v1101, %v1108
      %v1141 = vadd.f32 %v1102, %v1108
      %v1142 = vmax.f32 %v1110, 0.0
      %v1143 = vmax.f32 %v1111, 0.0
      %v1144 = vmax.f32 %v1112, 0.0
      %v1145 = vmax.f32 %v1113, 0.0
      %v1146 = vmax.f32 %v1114, 0.0
      %v1147 = vmax.f32 %v1115, 0.0
      %v1148 = vmax.f32 %v1116, 0.0
      %v1149 = vmax.f32 %v1117, 0.0
      %v1150 = vmax.f32 %v1118, 0.0
      %v1151 = vmax.f32 %v1119, 0.0
      %v1152 = vmax.f32 %v1120, 0.0
      %v1153 = vmax.f32 %v1121, 0.0
      %v1154 = vmax.f32 %v1122, 0.0
      %v1155 = vmax.f32 %v1123, 0.0
      %v1156 = vmax.f32 %v1124, 0.0
      %v1157 = vmax.f32 %v1125, 0.0
      %v1158 = vmax.f32 %v1126, 0.0
      %v1159 = vmax.f32 %v1127, 0.0
      %v1160 = vmax.f32 %v1128, 0.0
      %v1161 = vmax.f32 %v1129, 0.0
      %v1162 = vmax.f32 %v1130, 0.0
      %v1163 = vmax.f32 %v1131, 0.0
      %v1164 = vmax.f32 %v1132, 0.0
      %v1165 = vmax.f32 %v1133, 0.0
      %v1166 = vmax.f32 %v1134, 0.0
      %v1167 = vmax.f32 %v1135, 0.0
      %v1168 = vmax.f32 %v1136, 0.0
      %v1169 = vmax.f32 %v1137, 0.0
      %v1170 = vmax.f32 %v1138, 0.0
      %v1171 = vmax.f32 %v1139, 0.0
      %v1172 = vmax.f32 %v1140, 0.0
      %v1173 = vmax.f32 %v1141, 0.0
      %v1174 = vmax.f32 %v1142, %v1144
      %v1175 = vmax.f32 %v1143, %v1145
      %v1176 = vmax.f32 %v1146, %v1148
      %v1177 = vmax.f32 %v1147, %v1149
      %v1178 = vmax.f32 %v1150, %v1152
      %v1179 = vmax.f32 %v1151, %v1153
      %v1180 = vmax.f32 %v1154, %v1156
      %v1181 = vmax.f32 %v1155, %v1157
      %v1182 = vmax.f32 %v1158, %v1160
      %v1183 = vmax.f32 %v1159, %v1161
      %v1184 = vmax.f32 %v1162, %v1164
      %v1185 = vmax.f32 %v1163, %v1165
      %v1186 = vmax.f32 %v1166, %v1168
      %v1187 = vmax.f32 %v1167, %v1169
      %v1188 = vmax.f32 %v1170, %v1172
      %v1189 = vmax.f32 %v1171, %v1173
      %v1190 = vpack.c.bf16 %v1175, %v1174
      %v1191 = vpack.c.bf16 %v1177, %v1176
      %v1192 = vpack.c.bf16 %v1179, %v1178
      %v1193 = vpack.c.bf16 %v1181, %v1180
      %v1194 = vpack.c.bf16 %v1183, %v1182
      %v1195 = vpack.c.bf16 %v1185, %v1184
      %v1196 = vpack.c.bf16 %v1187, %v1186
      %v1197 = vpack.c.bf16 %v1189, %v1188
      %v1198 = vld [vmem:[%s3] sm:$0xf]
      %v1199 = vld [vmem:[%s3 + $0x4] sm:$0xf]
      %v1200 = vld [vmem:[%s3 + $0x8] sm:$0xf]
      %v1201 = vld [vmem:[%s3 + $0xc] sm:$0xf]
      %v1202 = vld [vmem:[%s3 + $0x10] sm:$0xf]
      %v1203 = vld [vmem:[%s3 + $0x14] sm:$0xf]
      %v1204 = vld [vmem:[%s3 + $0x18] sm:$0xf]
      %v1205 = vld [vmem:[%s3 + $0x1c] sm:$0xf]
      %v1206 = vld [vmem:[%s3 + $0x20] sm:$0xf]
      %v1207 = vld [vmem:[%s3 + $0x24] sm:$0xf]
      %v1208 = vld [vmem:[%s3 + $0x28] sm:$0xf]
      %v1209 = vld [vmem:[%s3 + $0x2c] sm:$0xf]
      %v1210 = vld [vmem:[%s3 + $0x30] sm:$0xf]
      %v1211 = vld [vmem:[%s3 + $0x34] sm:$0xf]
      %v1212 = vld [vmem:[%s3 + $0x38] sm:$0xf]
      %v1213 = vld [vmem:[%s3 + $0x3c] sm:$0xf]
      %s1214 = scalar_lea.vmem %s3, 64
      %v1215 = vld [vmem:[%s1214] sm:$0xf]
      %v1216 = vld [vmem:[%s1214 + $0x4] sm:$0xf]
      %v1217 = vld [vmem:[%s1214 + $0x8] sm:$0xf]
      %v1218 = vld [vmem:[%s1214 + $0xc] sm:$0xf]
      %v1219 = vld [vmem:[%s1214 + $0x10] sm:$0xf]
      %v1220 = vld [vmem:[%s1214 + $0x14] sm:$0xf]
      %v1221 = vld [vmem:[%s1214 + $0x18] sm:$0xf]
      %v1222 = vld [vmem:[%s1214 + $0x1c] sm:$0xf]
      %v1223 = vld [vmem:[%s1214 + $0x20] sm:$0xf]
      %v1224 = vld [vmem:[%s1214 + $0x24] sm:$0xf]
      %v1225 = vld [vmem:[%s1214 + $0x28] sm:$0xf]
      %v1226 = vld [vmem:[%s1214 + $0x2c] sm:$0xf]
      %v1227 = vld [vmem:[%s1214 + $0x30] sm:$0xf]
      %v1228 = vld [vmem:[%s1214 + $0x34] sm:$0xf]
      %v1229 = vld [vmem:[%s1214 + $0x38] sm:$0xf]
      %v1230 = vld [vmem:[%s1214 + $0x3c] sm:$0xf]
      %v1247 = vunpack.c.l.b16 %v1215
      %v1248 = vunpack.c.l.b16 %v1216
      %v1249 = vunpack.c.l.b16 %v1217
      %v1250 = vunpack.c.l.b16 %v1218
      %v1251 = vunpack.c.l.b16 %v1219
      %v1252 = vunpack.c.l.b16 %v1220
      %v1253 = vunpack.c.l.b16 %v1221
      %v1254 = vunpack.c.l.b16 %v1222
      %v1255 = vunpack.c.l.b16 %v1223
      %v1256 = vunpack.c.l.b16 %v1224
      %v1257 = vunpack.c.l.b16 %v1225
      %v1258 = vunpack.c.l.b16 %v1226
      %v1259 = vunpack.c.l.b16 %v1227
      %v1260 = vunpack.c.l.b16 %v1228
      %v1261 = vunpack.c.l.b16 %v1229
      %v1262 = vunpack.c.l.b16 %v1230
      %v1263 = vpack.c.b16 %v1248, %v1247
      %v1264 = vpack.c.b16 %v1250, %v1249
      %v1265 = vpack.c.b16 %v1252, %v1251
      %v1266 = vpack.c.b16 %v1254, %v1253
      %v1267 = vpack.c.b16 %v1256, %v1255
      %v1268 = vpack.c.b16 %v1258, %v1257
      %v1269 = vpack.c.b16 %v1260, %v1259
      %v1270 = vpack.c.b16 %v1262, %v1261
      %1279 = vmatprep.subr.bf16.mxu0 0
      %1280 = vmatpush1.bf16.msra.mxu0 %v1263
      %1281 = vmatprep.subr.bf16.mxu0 0
      %1282 = vmatpush1.bf16.msra.mxu0 %v1264
      %1283 = vmatprep.subr.bf16.mxu0 0
      %1284 = vmatpush1.bf16.msra.mxu0 %v1265
      %1285 = vmatprep.subr.bf16.mxu0 0
      %1286 = vmatpush1.bf16.msra.mxu0 %v1266
      %1287 = vmatprep.subr.bf16.mxu0 0
      %1288 = vmatpush1.bf16.msra.mxu0 %v1267
      %1289 = vmatprep.subr.bf16.mxu0 0
      %1290 = vmatpush1.bf16.msra.mxu0 %v1268
      %1291 = vmatprep.subr.bf16.mxu0 0
      %1292 = vmatpush1.bf16.msra.mxu0 %v1269
      %1293 = vmatprep.subr.bf16.mxu0 0
      %1294 = vmatpush1.bf16.msra.mxu0 %v1270
      %1295 = vmatprep.subr.bf16.mxu0 0
      %1296 = vmatpush1.bf16.msra.mxu0 0
      %1297 = vmatprep.subr.bf16.mxu0 0
      %1298 = vmatpush1.bf16.msra.mxu0 0
      %1299 = vmatprep.subr.bf16.mxu0 0
      %1300 = vmatpush1.bf16.msra.mxu0 0
      %1301 = vmatprep.subr.bf16.mxu0 0
      %1302 = vmatpush1.bf16.msra.mxu0 0
      %1303 = vmatprep.subr.bf16.mxu0 0
      %1304 = vmatpush1.bf16.msra.mxu0 0
      %1305 = vmatprep.subr.bf16.mxu0 0
      %1306 = vmatpush1.bf16.msra.mxu0 0
      %1307 = vmatprep.subr.bf16.mxu0 0
      %1308 = vmatpush1.bf16.msra.mxu0 0
      %1309 = vmatprep.subr.bf16.mxu0 0
      %1310 = vmatpush1.bf16.msra.mxu0 0
      %1311 = vmatprep.mubr.bf16.mxu0 0
      %1312 = vmatmul.mubr.bf16.gmra.mrb[0].mxu0 %v1191
      %v1313 = vpop.f32.mrb[0].mxu0
      %v1314 = vadd.f32 0.0, %v1313
      %v1315 = vpop.f32.mrb[0].mxu0
      %v1316 = vpop.f32.mrb[0].mxu0
      %v1317 = vadd.f32 0.0, %v1316
      %v1318 = vpop.f32.mrb[0].mxu0
      %1319 = vdwg.mxu0
      %v1336 = vunpack.c.l.b16 %v1198
      %v1337 = vunpack.c.l.b16 %v1199
      %v1338 = vunpack.c.l.b16 %v1200
      %v1339 = vunpack.c.l.b16 %v1201
      %v1340 = vunpack.c.l.b16 %v1202
      %v1341 = vunpack.c.l.b16 %v1203
      %v1342 = vunpack.c.l.b16 %v1204
      %v1343 = vunpack.c.l.b16 %v1205
      %v1344 = vunpack.c.l.b16 %v1206
      %v1345 = vunpack.c.l.b16 %v1207
      %v1346 = vunpack.c.l.b16 %v1208
      %v1347 = vunpack.c.l.b16 %v1209
      %v1348 = vunpack.c.l.b16 %v1210
      %v1349 = vunpack.c.l.b16 %v1211
      %v1350 = vunpack.c.l.b16 %v1212
      %v1351 = vunpack.c.l.b16 %v1213
      %v1352 = vpack.c.b16 %v1337, %v1336
      %v1353 = vpack.c.b16 %v1339, %v1338
      %v1354 = vpack.c.b16 %v1341, %v1340
      %v1355 = vpack.c.b16 %v1343, %v1342
      %v1356 = vpack.c.b16 %v1345, %v1344
      %v1357 = vpack.c.b16 %v1347, %v1346
      %v1358 = vpack.c.b16 %v1349, %v1348
      %v1359 = vpack.c.b16 %v1351, %v1350
      %1368 = vmatprep.subr.bf16.mxu0 0
      %1369 = vmatpush1.bf16.msra.mxu0 %v1352
      %1370 = vmatprep.subr.bf16.mxu0 0
      %1371 = vmatpush1.bf16.msra.mxu0 %v1353
      %1372 = vmatprep.subr.bf16.mxu0 0
      %1373 = vmatpush1.bf16.msra.mxu0 %v1354
      %1374 = vmatprep.subr.bf16.mxu0 0
      %1375 = vmatpush1.bf16.msra.mxu0 %v1355
      %1376 = vmatprep.subr.bf16.mxu0 0
      %1377 = vmatpush1.bf16.msra.mxu0 %v1356
      %1378 = vmatprep.subr.bf16.mxu0 0
      %1379 = vmatpush1.bf16.msra.mxu0 %v1357
      %1380 = vmatprep.subr.bf16.mxu0 0
      %1381 = vmatpush1.bf16.msra.mxu0 %v1358
      %1382 = vmatprep.subr.bf16.mxu0 0
      %1383 = vmatpush1.bf16.msra.mxu0 %v1359
      %1384 = vmatprep.subr.bf16.mxu0 0
      %1385 = vmatpush1.bf16.msra.mxu0 0
      %1386 = vmatprep.subr.bf16.mxu0 0
      %1387 = vmatpush1.bf16.msra.mxu0 0
      %1388 = vmatprep.subr.bf16.mxu0 0
      %1389 = vmatpush1.bf16.msra.mxu0 0
      %1390 = vmatprep.subr.bf16.mxu0 0
      %1391 = vmatpush1.bf16.msra.mxu0 0
      %1392 = vmatprep.subr.bf16.mxu0 0
      %1393 = vmatpush1.bf16.msra.mxu0 0
      %1394 = vmatprep.subr.bf16.mxu0 0
      %1395 = vmatpush1.bf16.msra.mxu0 0
      %1396 = vmatprep.subr.bf16.mxu0 0
      %1397 = vmatpush1.bf16.msra.mxu0 0
      %1398 = vmatprep.subr.bf16.mxu0 0
      %1399 = vmatpush1.bf16.msra.mxu0 0
      %1400 = vmatprep.mubr.bf16.mxu0 0
      %1401 = vmatmul.mubr.bf16.gmra.mrb[0].mxu0 %v1190
      %v1402 = vpop.f32.mrb[0].mxu0
      %v1403 = vadd.f32 %v1314, %v1402
      %v1404 = vpop.f32.mrb[0].mxu0
      %v1405 = vpop.f32.mrb[0].mxu0
      %v1406 = vadd.f32 %v1317, %v1405
      %v1407 = vpop.f32.mrb[0].mxu0
      %1408 = vdwg.mxu0
      %s1409 = scalar_lea.vmem %s3, 128
      %v1410 = vld [vmem:[%s1409] sm:$0xf]
      %v1411 = vld [vmem:[%s1409 + $0x4] sm:$0xf]
      %v1412 = vld [vmem:[%s1409 + $0x8] sm:$0xf]
      %v1413 = vld [vmem:[%s1409 + $0xc] sm:$0xf]
      %v1414 = vld [vmem:[%s1409 + $0x10] sm:$0xf]
      %v1415 = vld [vmem:[%s1409 + $0x14] sm:$0xf]
      %v1416 = vld [vmem:[%s1409 + $0x18] sm:$0xf]
      %v1417 = vld [vmem:[%s1409 + $0x1c] sm:$0xf]
      %v1418 = vld [vmem:[%s1409 + $0x20] sm:$0xf]
      %v1419 = vld [vmem:[%s1409 + $0x24] sm:$0xf]
      %v1420 = vld [vmem:[%s1409 + $0x28] sm:$0xf]
      %v1421 = vld [vmem:[%s1409 + $0x2c] sm:$0xf]
      %v1422 = vld [vmem:[%s1409 + $0x30] sm:$0xf]
      %v1423 = vld [vmem:[%s1409 + $0x34] sm:$0xf]
      %v1424 = vld [vmem:[%s1409 + $0x38] sm:$0xf]
      %v1425 = vld [vmem:[%s1409 + $0x3c] sm:$0xf]
      %v1442 = vunpack.c.l.b16 %v1410
      %v1443 = vunpack.c.l.b16 %v1411
      %v1444 = vunpack.c.l.b16 %v1412
      %v1445 = vunpack.c.l.b16 %v1413
      %v1446 = vunpack.c.l.b16 %v1414
      %v1447 = vunpack.c.l.b16 %v1415
      %v1448 = vunpack.c.l.b16 %v1416
      %v1449 = vunpack.c.l.b16 %v1417
      %v1450 = vunpack.c.l.b16 %v1418
      %v1451 = vunpack.c.l.b16 %v1419
      %v1452 = vunpack.c.l.b16 %v1420
      %v1453 = vunpack.c.l.b16 %v1421
      %v1454 = vunpack.c.l.b16 %v1422
      %v1455 = vunpack.c.l.b16 %v1423
      %v1456 = vunpack.c.l.b16 %v1424
      %v1457 = vunpack.c.l.b16 %v1425
      %v1458 = vpack.c.b16 %v1443, %v1442
      %v1459 = vpack.c.b16 %v1445, %v1444
      %v1460 = vpack.c.b16 %v1447, %v1446
      %v1461 = vpack.c.b16 %v1449, %v1448
      %v1462 = vpack.c.b16 %v1451, %v1450
      %v1463 = vpack.c.b16 %v1453, %v1452
      %v1464 = vpack.c.b16 %v1455, %v1454
      %v1465 = vpack.c.b16 %v1457, %v1456
      %1474 = vmatprep.subr.bf16.mxu0 0
      %1475 = vmatpush1.bf16.msra.mxu0 %v1458
      %1476 = vmatprep.subr.bf16.mxu0 0
      %1477 = vmatpush1.bf16.msra.mxu0 %v1459
      %1478 = vmatprep.subr.bf16.mxu0 0
      %1479 = vmatpush1.bf16.msra.mxu0 %v1460
      %1480 = vmatprep.subr.bf16.mxu0 0
      %1481 = vmatpush1.bf16.msra.mxu0 %v1461
      %1482 = vmatprep.subr.bf16.mxu0 0
      %1483 = vmatpush1.bf16.msra.mxu0 %v1462
      %1484 = vmatprep.subr.bf16.mxu0 0
      %1485 = vmatpush1.bf16.msra.mxu0 %v1463
      %1486 = vmatprep.subr.bf16.mxu0 0
      %1487 = vmatpush1.bf16.msra.mxu0 %v1464
      %1488 = vmatprep.subr.bf16.mxu0 0
      %1489 = vmatpush1.bf16.msra.mxu0 %v1465
      %1490 = vmatprep.subr.bf16.mxu0 0
      %1491 = vmatpush1.bf16.msra.mxu0 0
      %1492 = vmatprep.subr.bf16.mxu0 0
      %1493 = vmatpush1.bf16.msra.mxu0 0
      %1494 = vmatprep.subr.bf16.mxu0 0
      %1495 = vmatpush1.bf16.msra.mxu0 0
      %1496 = vmatprep.subr.bf16.mxu0 0
      %1497 = vmatpush1.bf16.msra.mxu0 0
      %1498 = vmatprep.subr.bf16.mxu0 0
      %1499 = vmatpush1.bf16.msra.mxu0 0
      %1500 = vmatprep.subr.bf16.mxu0 0
      %1501 = vmatpush1.bf16.msra.mxu0 0
      %1502 = vmatprep.subr.bf16.mxu0 0
      %1503 = vmatpush1.bf16.msra.mxu0 0
      %1504 = vmatprep.subr.bf16.mxu0 0
      %1505 = vmatpush1.bf16.msra.mxu0 0
      %1506 = vmatprep.mubr.bf16.mxu0 0
      %1507 = vmatmul.mubr.bf16.gmra.mrb[0].mxu0 %v1192
      %v1508 = vpop.f32.mrb[0].mxu0
      %v1509 = vadd.f32 0.0, %v1508
      %v1510 = vpop.f32.mrb[0].mxu0
      %v1511 = vpop.f32.mrb[0].mxu0
      %v1512 = vadd.f32 0.0, %v1511
      %v1513 = vpop.f32.mrb[0].mxu0
      %1514 = vdwg.mxu0
      %v1515 = vadd.f32 %v1403, %v1509
      %v1516 = vadd.f32 %v1406, %v1512
      %s1517 = scalar_lea.vmem %s3, 192
      %v1518 = vld [vmem:[%s1517] sm:$0xf]
      %v1519 = vld [vmem:[%s1517 + $0x4] sm:$0xf]
      %v1520 = vld [vmem:[%s1517 + $0x8] sm:$0xf]
      %v1521 = vld [vmem:[%s1517 + $0xc] sm:$0xf]
      %v1522 = vld [vmem:[%s1517 + $0x10] sm:$0xf]
      %v1523 = vld [vmem:[%s1517 + $0x14] sm:$0xf]
      %v1524 = vld [vmem:[%s1517 + $0x18] sm:$0xf]
      %v1525 = vld [vmem:[%s1517 + $0x1c] sm:$0xf]
      %v1526 = vld [vmem:[%s1517 + $0x20] sm:$0xf]
      %v1527 = vld [vmem:[%s1517 + $0x24] sm:$0xf]
      %v1528 = vld [vmem:[%s1517 + $0x28] sm:$0xf]
      %v1529 = vld [vmem:[%s1517 + $0x2c] sm:$0xf]
      %v1530 = vld [vmem:[%s1517 + $0x30] sm:$0xf]
      %v1531 = vld [vmem:[%s1517 + $0x34] sm:$0xf]
      %v1532 = vld [vmem:[%s1517 + $0x38] sm:$0xf]
      %v1533 = vld [vmem:[%s1517 + $0x3c] sm:$0xf]
      %v1550 = vunpack.c.l.b16 %v1518
      %v1551 = vunpack.c.l.b16 %v1519
      %v1552 = vunpack.c.l.b16 %v1520
      %v1553 = vunpack.c.l.b16 %v1521
      %v1554 = vunpack.c.l.b16 %v1522
      %v1555 = vunpack.c.l.b16 %v1523
      %v1556 = vunpack.c.l.b16 %v1524
      %v1557 = vunpack.c.l.b16 %v1525
      %v1558 = vunpack.c.l.b16 %v1526
      %v1559 = vunpack.c.l.b16 %v1527
      %v1560 = vunpack.c.l.b16 %v1528
      %v1561 = vunpack.c.l.b16 %v1529
      %v1562 = vunpack.c.l.b16 %v1530
      %v1563 = vunpack.c.l.b16 %v1531
      %v1564 = vunpack.c.l.b16 %v1532
      %v1565 = vunpack.c.l.b16 %v1533
      %v1566 = vpack.c.b16 %v1551, %v1550
      %v1567 = vpack.c.b16 %v1553, %v1552
      %v1568 = vpack.c.b16 %v1555, %v1554
      %v1569 = vpack.c.b16 %v1557, %v1556
      %v1570 = vpack.c.b16 %v1559, %v1558
      %v1571 = vpack.c.b16 %v1561, %v1560
      %v1572 = vpack.c.b16 %v1563, %v1562
      %v1573 = vpack.c.b16 %v1565, %v1564
      %1582 = vmatprep.subr.bf16.mxu0 0
      %1583 = vmatpush1.bf16.msra.mxu0 %v1566
      %1584 = vmatprep.subr.bf16.mxu0 0
      %1585 = vmatpush1.bf16.msra.mxu0 %v1567
      %1586 = vmatprep.subr.bf16.mxu0 0
      %1587 = vmatpush1.bf16.msra.mxu0 %v1568
      %1588 = vmatprep.subr.bf16.mxu0 0
      %1589 = vmatpush1.bf16.msra.mxu0 %v1569
      %1590 = vmatprep.subr.bf16.mxu0 0
      %1591 = vmatpush1.bf16.msra.mxu0 %v1570
      %1592 = vmatprep.subr.bf16.mxu0 0
      %1593 = vmatpush1.bf16.msra.mxu0 %v1571
      %1594 = vmatprep.subr.bf16.mxu0 0
      %1595 = vmatpush1.bf16.msra.mxu0 %v1572
      %1596 = vmatprep.subr.bf16.mxu0 0
      %1597 = vmatpush1.bf16.msra.mxu0 %v1573
      %1598 = vmatprep.subr.bf16.mxu0 0
      %1599 = vmatpush1.bf16.msra.mxu0 0
      %1600 = vmatprep.subr.bf16.mxu0 0
      %1601 = vmatpush1.bf16.msra.mxu0 0
      %1602 = vmatprep.subr.bf16.mxu0 0
      %1603 = vmatpush1.bf16.msra.mxu0 0
      %1604 = vmatprep.subr.bf16.mxu0 0
      %1605 = vmatpush1.bf16.msra.mxu0 0
      %1606 = vmatprep.subr.bf16.mxu0 0
      %1607 = vmatpush1.bf16.msra.mxu0 0
      %1608 = vmatprep.subr.bf16.mxu0 0
      %1609 = vmatpush1.bf16.msra.mxu0 0
      %1610 = vmatprep.subr.bf16.mxu0 0
      %1611 = vmatpush1.bf16.msra.mxu0 0
      %1612 = vmatprep.subr.bf16.mxu0 0
      %1613 = vmatpush1.bf16.msra.mxu0 0
      %1614 = vmatprep.mubr.bf16.mxu0 0
      %1615 = vmatmul.mubr.bf16.gmra.mrb[0].mxu0 %v1193
      %v1616 = vpop.f32.mrb[0].mxu0
      %v1617 = vadd.f32 0.0, %v1616
      %v1618 = vpop.f32.mrb[0].mxu0
      %v1619 = vpop.f32.mrb[0].mxu0
      %v1620 = vadd.f32 0.0, %v1619
      %v1621 = vpop.f32.mrb[0].mxu0
      %1622 = vdwg.mxu0
      %v1623 = vadd.f32 %v1515, %v1617
      %v1624 = vadd.f32 %v1516, %v1620
      %s1625 = scalar_lea.vmem %s3, 256
      %v1626 = vld [vmem:[%s1625] sm:$0xf]
      %v1627 = vld [vmem:[%s1625 + $0x4] sm:$0xf]
      %v1628 = vld [vmem:[%s1625 + $0x8] sm:$0xf]
      %v1629 = vld [vmem:[%s1625 + $0xc] sm:$0xf]
      %v1630 = vld [vmem:[%s1625 + $0x10] sm:$0xf]
      %v1631 = vld [vmem:[%s1625 + $0x14] sm:$0xf]
      %v1632 = vld [vmem:[%s1625 + $0x18] sm:$0xf]
      %v1633 = vld [vmem:[%s1625 + $0x1c] sm:$0xf]
      %v1634 = vld [vmem:[%s1625 + $0x20] sm:$0xf]
      %v1635 = vld [vmem:[%s1625 + $0x24] sm:$0xf]
      %v1636 = vld [vmem:[%s1625 + $0x28] sm:$0xf]
      %v1637 = vld [vmem:[%s1625 + $0x2c] sm:$0xf]
      %v1638 = vld [vmem:[%s1625 + $0x30] sm:$0xf]
      %v1639 = vld [vmem:[%s1625 + $0x34] sm:$0xf]
      %v1640 = vld [vmem:[%s1625 + $0x38] sm:$0xf]
      %v1641 = vld [vmem:[%s1625 + $0x3c] sm:$0xf]
      %v1658 = vunpack.c.l.b16 %v1626
      %v1659 = vunpack.c.l.b16 %v1627
      %v1660 = vunpack.c.l.b16 %v1628
      %v1661 = vunpack.c.l.b16 %v1629
      %v1662 = vunpack.c.l.b16 %v1630
      %v1663 = vunpack.c.l.b16 %v1631
      %v1664 = vunpack.c.l.b16 %v1632
      %v1665 = vunpack.c.l.b16 %v1633
      %v1666 = vunpack.c.l.b16 %v1634
      %v1667 = vunpack.c.l.b16 %v1635
      %v1668 = vunpack.c.l.b16 %v1636
      %v1669 = vunpack.c.l.b16 %v1637
      %v1670 = vunpack.c.l.b16 %v1638
      %v1671 = vunpack.c.l.b16 %v1639
      %v1672 = vunpack.c.l.b16 %v1640
      %v1673 = vunpack.c.l.b16 %v1641
      %v1674 = vpack.c.b16 %v1659, %v1658
      %v1675 = vpack.c.b16 %v1661, %v1660
      %v1676 = vpack.c.b16 %v1663, %v1662
      %v1677 = vpack.c.b16 %v1665, %v1664
      %v1678 = vpack.c.b16 %v1667, %v1666
      %v1679 = vpack.c.b16 %v1669, %v1668
      %v1680 = vpack.c.b16 %v1671, %v1670
      %v1681 = vpack.c.b16 %v1673, %v1672
      %1690 = vmatprep.subr.bf16.mxu0 0
      %1691 = vmatpush1.bf16.msra.mxu0 %v1674
      %1692 = vmatprep.subr.bf16.mxu0 0
      %1693 = vmatpush1.bf16.msra.mxu0 %v1675
      %1694 = vmatprep.subr.bf16.mxu0 0
      %1695 = vmatpush1.bf16.msra.mxu0 %v1676
      %1696 = vmatprep.subr.bf16.mxu0 0
      %1697 = vmatpush1.bf16.msra.mxu0 %v1677
      %1698 = vmatprep.subr.bf16.mxu0 0
      %1699 = vmatpush1.bf16.msra.mxu0 %v1678
      %1700 = vmatprep.subr.bf16.mxu0 0
      %1701 = vmatpush1.bf16.msra.mxu0 %v1679
      %1702 = vmatprep.subr.bf16.mxu0 0
      %1703 = vmatpush1.bf16.msra.mxu0 %v1680
      %1704 = vmatprep.subr.bf16.mxu0 0
      %1705 = vmatpush1.bf16.msra.mxu0 %v1681
      %1706 = vmatprep.subr.bf16.mxu0 0
      %1707 = vmatpush1.bf16.msra.mxu0 0
      %1708 = vmatprep.subr.bf16.mxu0 0
      %1709 = vmatpush1.bf16.msra.mxu0 0
      %1710 = vmatprep.subr.bf16.mxu0 0
      %1711 = vmatpush1.bf16.msra.mxu0 0
      %1712 = vmatprep.subr.bf16.mxu0 0
      %1713 = vmatpush1.bf16.msra.mxu0 0
      %1714 = vmatprep.subr.bf16.mxu0 0
      %1715 = vmatpush1.bf16.msra.mxu0 0
      %1716 = vmatprep.subr.bf16.mxu0 0
      %1717 = vmatpush1.bf16.msra.mxu0 0
      %1718 = vmatprep.subr.bf16.mxu0 0
      %1719 = vmatpush1.bf16.msra.mxu0 0
      %1720 = vmatprep.subr.bf16.mxu0 0
      %1721 = vmatpush1.bf16.msra.mxu0 0
      %1722 = vmatprep.mubr.bf16.mxu0 0
      %1723 = vmatmul.mubr.bf16.gmra.mrb[0].mxu0 %v1194
      %v1724 = vpop.f32.mrb[0].mxu0
      %v1725 = vadd.f32 0.0, %v1724
      %v1726 = vpop.f32.mrb[0].mxu0
      %v1727 = vpop.f32.mrb[0].mxu0
      %v1728 = vadd.f32 0.0, %v1727
      %v1729 = vpop.f32.mrb[0].mxu0
      %1730 = vdwg.mxu0
      %v1731 = vadd.f32 %v1623, %v1725
      %v1732 = vadd.f32 %v1624, %v1728
      %s1733 = scalar_lea.vmem %s3, 320
      %v1734 = vld [vmem:[%s1733] sm:$0xf]
      %v1735 = vld [vmem:[%s1733 + $0x4] sm:$0xf]
      %v1736 = vld [vmem:[%s1733 + $0x8] sm:$0xf]
      %v1737 = vld [vmem:[%s1733 + $0xc] sm:$0xf]
      %v1738 = vld [vmem:[%s1733 + $0x10] sm:$0xf]
      %v1739 = vld [vmem:[%s1733 + $0x14] sm:$0xf]
      %v1740 = vld [vmem:[%s1733 + $0x18] sm:$0xf]
      %v1741 = vld [vmem:[%s1733 + $0x1c] sm:$0xf]
      %v1742 = vld [vmem:[%s1733 + $0x20] sm:$0xf]
      %v1743 = vld [vmem:[%s1733 + $0x24] sm:$0xf]
      %v1744 = vld [vmem:[%s1733 + $0x28] sm:$0xf]
      %v1745 = vld [vmem:[%s1733 + $0x2c] sm:$0xf]
      %v1746 = vld [vmem:[%s1733 + $0x30] sm:$0xf]
      %v1747 = vld [vmem:[%s1733 + $0x34] sm:$0xf]
      %v1748 = vld [vmem:[%s1733 + $0x38] sm:$0xf]
      %v1749 = vld [vmem:[%s1733 + $0x3c] sm:$0xf]
      %v1766 = vunpack.c.l.b16 %v1734
      %v1767 = vunpack.c.l.b16 %v1735
      %v1768 = vunpack.c.l.b16 %v1736
      %v1769 = vunpack.c.l.b16 %v1737
      %v1770 = vunpack.c.l.b16 %v1738
      %v1771 = vunpack.c.l.b16 %v1739
      %v1772 = vunpack.c.l.b16 %v1740
      %v1773 = vunpack.c.l.b16 %v1741
      %v1774 = vunpack.c.l.b16 %v1742
      %v1775 = vunpack.c.l.b16 %v1743
      %v1776 = vunpack.c.l.b16 %v1744
      %v1777 = vunpack.c.l.b16 %v1745
      %v1778 = vunpack.c.l.b16 %v1746
      %v1779 = vunpack.c.l.b16 %v1747
      %v1780 = vunpack.c.l.b16 %v1748
      %v1781 = vunpack.c.l.b16 %v1749
      %v1782 = vpack.c.b16 %v1767, %v1766
      %v1783 = vpack.c.b16 %v1769, %v1768
      %v1784 = vpack.c.b16 %v1771, %v1770
      %v1785 = vpack.c.b16 %v1773, %v1772
      %v1786 = vpack.c.b16 %v1775, %v1774
      %v1787 = vpack.c.b16 %v1777, %v1776
      %v1788 = vpack.c.b16 %v1779, %v1778
      %v1789 = vpack.c.b16 %v1781, %v1780
      %1798 = vmatprep.subr.bf16.mxu0 0
      %1799 = vmatpush1.bf16.msra.mxu0 %v1782
      %1800 = vmatprep.subr.bf16.mxu0 0
      %1801 = vmatpush1.bf16.msra.mxu0 %v1783
      %1802 = vmatprep.subr.bf16.mxu0 0
      %1803 = vmatpush1.bf16.msra.mxu0 %v1784
      %1804 = vmatprep.subr.bf16.mxu0 0
      %1805 = vmatpush1.bf16.msra.mxu0 %v1785
      %1806 = vmatprep.subr.bf16.mxu0 0
      %1807 = vmatpush1.bf16.msra.mxu0 %v1786
      %1808 = vmatprep.subr.bf16.mxu0 0
      %1809 = vmatpush1.bf16.msra.mxu0 %v1787
      %1810 = vmatprep.subr.bf16.mxu0 0
      %1811 = vmatpush1.bf16.msra.mxu0 %v1788
      %1812 = vmatprep.subr.bf16.mxu0 0
      %1813 = vmatpush1.bf16.msra.mxu0 %v1789
      %1814 = vmatprep.subr.bf16.mxu0 0
      %1815 = vmatpush1.bf16.msra.mxu0 0
      %1816 = vmatprep.subr.bf16.mxu0 0
      %1817 = vmatpush1.bf16.msra.mxu0 0
      %1818 = vmatprep.subr.bf16.mxu0 0
      %1819 = vmatpush1.bf16.msra.mxu0 0
      %1820 = vmatprep.subr.bf16.mxu0 0
      %1821 = vmatpush1.bf16.msra.mxu0 0
      %1822 = vmatprep.subr.bf16.mxu0 0
      %1823 = vmatpush1.bf16.msra.mxu0 0
      %1824 = vmatprep.subr.bf16.mxu0 0
      %1825 = vmatpush1.bf16.msra.mxu0 0
      %1826 = vmatprep.subr.bf16.mxu0 0
      %1827 = vmatpush1.bf16.msra.mxu0 0
      %1828 = vmatprep.subr.bf16.mxu0 0
      %1829 = vmatpush1.bf16.msra.mxu0 0
      %1830 = vmatprep.mubr.bf16.mxu0 0
      %1831 = vmatmul.mubr.bf16.gmra.mrb[0].mxu0 %v1195
      %v1832 = vpop.f32.mrb[0].mxu0
      %v1833 = vadd.f32 0.0, %v1832
      %v1834 = vpop.f32.mrb[0].mxu0
      %v1835 = vpop.f32.mrb[0].mxu0
      %v1836 = vadd.f32 0.0, %v1835
      %v1837 = vpop.f32.mrb[0].mxu0
      %1838 = vdwg.mxu0
      %v1839 = vadd.f32 %v1731, %v1833
      %v1840 = vadd.f32 %v1732, %v1836
      %s1841 = scalar_lea.vmem %s3, 384
      %v1842 = vld [vmem:[%s1841] sm:$0xf]
      %v1843 = vld [vmem:[%s1841 + $0x4] sm:$0xf]
      %v1844 = vld [vmem:[%s1841 + $0x8] sm:$0xf]
      %v1845 = vld [vmem:[%s1841 + $0xc] sm:$0xf]
      %v1846 = vld [vmem:[%s1841 + $0x10] sm:$0xf]
      %v1847 = vld [vmem:[%s1841 + $0x14] sm:$0xf]
      %v1848 = vld [vmem:[%s1841 + $0x18] sm:$0xf]
      %v1849 = vld [vmem:[%s1841 + $0x1c] sm:$0xf]
      %v1850 = vld [vmem:[%s1841 + $0x20] sm:$0xf]
      %v1851 = vld [vmem:[%s1841 + $0x24] sm:$0xf]
      %v1852 = vld [vmem:[%s1841 + $0x28] sm:$0xf]
      %v1853 = vld [vmem:[%s1841 + $0x2c] sm:$0xf]
      %v1854 = vld [vmem:[%s1841 + $0x30] sm:$0xf]
      %v1855 = vld [vmem:[%s1841 + $0x34] sm:$0xf]
      %v1856 = vld [vmem:[%s1841 + $0x38] sm:$0xf]
      %v1857 = vld [vmem:[%s1841 + $0x3c] sm:$0xf]
      %v1874 = vunpack.c.l.b16 %v1842
      %v1875 = vunpack.c.l.b16 %v1843
      %v1876 = vunpack.c.l.b16 %v1844
      %v1877 = vunpack.c.l.b16 %v1845
      %v1878 = vunpack.c.l.b16 %v1846
      %v1879 = vunpack.c.l.b16 %v1847
      %v1880 = vunpack.c.l.b16 %v1848
      %v1881 = vunpack.c.l.b16 %v1849
      %v1882 = vunpack.c.l.b16 %v1850
      %v1883 = vunpack.c.l.b16 %v1851
      %v1884 = vunpack.c.l.b16 %v1852
      %v1885 = vunpack.c.l.b16 %v1853
      %v1886 = vunpack.c.l.b16 %v1854
      %v1887 = vunpack.c.l.b16 %v1855
      %v1888 = vunpack.c.l.b16 %v1856
      %v1889 = vunpack.c.l.b16 %v1857
      %v1890 = vpack.c.b16 %v1875, %v1874
      %v1891 = vpack.c.b16 %v1877, %v1876
      %v1892 = vpack.c.b16 %v1879, %v1878
      %v1893 = vpack.c.b16 %v1881, %v1880
      %v1894 = vpack.c.b16 %v1883, %v1882
      %v1895 = vpack.c.b16 %v1885, %v1884
      %v1896 = vpack.c.b16 %v1887, %v1886
      %v1897 = vpack.c.b16 %v1889, %v1888
      %1906 = vmatprep.subr.bf16.mxu0 0
      %1907 = vmatpush1.bf16.msra.mxu0 %v1890
      %1908 = vmatprep.subr.bf16.mxu0 0
      %1909 = vmatpush1.bf16.msra.mxu0 %v1891
      %1910 = vmatprep.subr.bf16.mxu0 0
      %1911 = vmatpush1.bf16.msra.mxu0 %v1892
      %1912 = vmatprep.subr.bf16.mxu0 0
      %1913 = vmatpush1.bf16.msra.mxu0 %v1893
      %1914 = vmatprep.subr.bf16.mxu0 0
      %1915 = vmatpush1.bf16.msra.mxu0 %v1894
      %1916 = vmatprep.subr.bf16.mxu0 0
      %1917 = vmatpush1.bf16.msra.mxu0 %v1895
      %1918 = vmatprep.subr.bf16.mxu0 0
      %1919 = vmatpush1.bf16.msra.mxu0 %v1896
      %1920 = vmatprep.subr.bf16.mxu0 0
      %1921 = vmatpush1.bf16.msra.mxu0 %v1897
      %1922 = vmatprep.subr.bf16.mxu0 0
      %1923 = vmatpush1.bf16.msra.mxu0 0
      %1924 = vmatprep.subr.bf16.mxu0 0
      %1925 = vmatpush1.bf16.msra.mxu0 0
      %1926 = vmatprep.subr.bf16.mxu0 0
      %1927 = vmatpush1.bf16.msra.mxu0 0
      %1928 = vmatprep.subr.bf16.mxu0 0
      %1929 = vmatpush1.bf16.msra.mxu0 0
      %1930 = vmatprep.subr.bf16.mxu0 0
      %1931 = vmatpush1.bf16.msra.mxu0 0
      %1932 = vmatprep.subr.bf16.mxu0 0
      %1933 = vmatpush1.bf16.msra.mxu0 0
      %1934 = vmatprep.subr.bf16.mxu0 0
      %1935 = vmatpush1.bf16.msra.mxu0 0
      %1936 = vmatprep.subr.bf16.mxu0 0
      %1937 = vmatpush1.bf16.msra.mxu0 0
      %1938 = vmatprep.mubr.bf16.mxu0 0
      %1939 = vmatmul.mubr.bf16.gmra.mrb[0].mxu0 %v1196
      %v1940 = vpop.f32.mrb[0].mxu0
      %v1941 = vadd.f32 0.0, %v1940
      %v1942 = vpop.f32.mrb[0].mxu0
      %v1943 = vpop.f32.mrb[0].mxu0
      %v1944 = vadd.f32 0.0, %v1943
      %v1945 = vpop.f32.mrb[0].mxu0
      %1946 = vdwg.mxu0
      %v1947 = vadd.f32 %v1839, %v1941
      %v1948 = vadd.f32 %v1840, %v1944
      %s1949 = scalar_lea.vmem %s3, 448
      %v1950 = vld [vmem:[%s1949] sm:$0xf]
      %v1951 = vld [vmem:[%s1949 + $0x4] sm:$0xf]
      %v1952 = vld [vmem:[%s1949 + $0x8] sm:$0xf]
      %v1953 = vld [vmem:[%s1949 + $0xc] sm:$0xf]
      %v1954 = vld [vmem:[%s1949 + $0x10] sm:$0xf]
      %v1955 = vld [vmem:[%s1949 + $0x14] sm:$0xf]
      %v1956 = vld [vmem:[%s1949 + $0x18] sm:$0xf]
      %v1957 = vld [vmem:[%s1949 + $0x1c] sm:$0xf]
      %v1958 = vld [vmem:[%s1949 + $0x20] sm:$0xf]
      %v1959 = vld [vmem:[%s1949 + $0x24] sm:$0xf]
      %v1960 = vld [vmem:[%s1949 + $0x28] sm:$0xf]
      %v1961 = vld [vmem:[%s1949 + $0x2c] sm:$0xf]
      %v1962 = vld [vmem:[%s1949 + $0x30] sm:$0xf]
      %v1963 = vld [vmem:[%s1949 + $0x34] sm:$0xf]
      %v1964 = vld [vmem:[%s1949 + $0x38] sm:$0xf]
      %v1965 = vld [vmem:[%s1949 + $0x3c] sm:$0xf]
      %v1982 = vunpack.c.l.b16 %v1950
      %v1983 = vunpack.c.l.b16 %v1951
      %v1984 = vunpack.c.l.b16 %v1952
      %v1985 = vunpack.c.l.b16 %v1953
      %v1986 = vunpack.c.l.b16 %v1954
      %v1987 = vunpack.c.l.b16 %v1955
      %v1988 = vunpack.c.l.b16 %v1956
      %v1989 = vunpack.c.l.b16 %v1957
      %v1990 = vunpack.c.l.b16 %v1958
      %v1991 = vunpack.c.l.b16 %v1959
      %v1992 = vunpack.c.l.b16 %v1960
      %v1993 = vunpack.c.l.b16 %v1961
      %v1994 = vunpack.c.l.b16 %v1962
      %v1995 = vunpack.c.l.b16 %v1963
      %v1996 = vunpack.c.l.b16 %v1964
      %v1997 = vunpack.c.l.b16 %v1965
      %v1998 = vpack.c.b16 %v1983, %v1982
      %v1999 = vpack.c.b16 %v1985, %v1984
      %v2000 = vpack.c.b16 %v1987, %v1986
      %v2001 = vpack.c.b16 %v1989, %v1988
      %v2002 = vpack.c.b16 %v1991, %v1990
      %v2003 = vpack.c.b16 %v1993, %v1992
      %v2004 = vpack.c.b16 %v1995, %v1994
      %v2005 = vpack.c.b16 %v1997, %v1996
      %2014 = vmatprep.subr.bf16.mxu0 0
      %2015 = vmatpush1.bf16.msra.mxu0 %v1998
      %2016 = vmatprep.subr.bf16.mxu0 0
      %2017 = vmatpush1.bf16.msra.mxu0 %v1999
      %2018 = vmatprep.subr.bf16.mxu0 0
      %2019 = vmatpush1.bf16.msra.mxu0 %v2000
      %2020 = vmatprep.subr.bf16.mxu0 0
      %2021 = vmatpush1.bf16.msra.mxu0 %v2001
      %2022 = vmatprep.subr.bf16.mxu0 0
      %2023 = vmatpush1.bf16.msra.mxu0 %v2002
      %2024 = vmatprep.subr.bf16.mxu0 0
      %2025 = vmatpush1.bf16.msra.mxu0 %v2003
      %2026 = vmatprep.subr.bf16.mxu0 0
      %2027 = vmatpush1.bf16.msra.mxu0 %v2004
      %2028 = vmatprep.subr.bf16.mxu0 0
      %2029 = vmatpush1.bf16.msra.mxu0 %v2005
      %2030 = vmatprep.subr.bf16.mxu0 0
      %2031 = vmatpush1.bf16.msra.mxu0 0
      %2032 = vmatprep.subr.bf16.mxu0 0
      %2033 = vmatpush1.bf16.msra.mxu0 0
      %2034 = vmatprep.subr.bf16.mxu0 0
      %2035 = vmatpush1.bf16.msra.mxu0 0
      %2036 = vmatprep.subr.bf16.mxu0 0
      %2037 = vmatpush1.bf16.msra.mxu0 0
      %2038 = vmatprep.subr.bf16.mxu0 0
      %2039 = vmatpush1.bf16.msra.mxu0 0
      %2040 = vmatprep.subr.bf16.mxu0 0
      %2041 = vmatpush1.bf16.msra.mxu0 0
      %2042 = vmatprep.subr.bf16.mxu0 0
      %2043 = vmatpush1.bf16.msra.mxu0 0
      %2044 = vmatprep.subr.bf16.mxu0 0
      %2045 = vmatpush1.bf16.msra.mxu0 0
      %2046 = vmatprep.mubr.bf16.mxu0 0
      %2047 = vmatmul.mubr.bf16.gmra.mrb[0].mxu0 %v1197
      %v2048 = vpop.f32.mrb[0].mxu0
      %v2049 = vadd.f32 0.0, %v2048
      %v2050 = vpop.f32.mrb[0].mxu0
      %v2051 = vpop.f32.mrb[0].mxu0
      %v2052 = vadd.f32 0.0, %v2051
      %v2053 = vpop.f32.mrb[0].mxu0
      %2054 = vdwg.mxu0
      %v2055 = vadd.f32 %v1947, %v2049
      %v2056 = vadd.f32 %v1948, %v2052
      %v2057 = vld [vmem:[%s4] sm:$0x1]
      %v2059 = vlaneseq
      %v2060 = vshrl.u32 %v2059, 7
      %v2061 = vsub.s32 0, %v2060
      %v2062 = vrot.slane %v2057, %v2061
      %v2064 = vadd.f32 %v2055, %v2062
      %v2065 = vadd.f32 %v2056, %v2062
      %2066 = vst [vmem:[%s226] sm:$0xff] %v2064
      %2067 = vst [vmem:[%s226 + $0x8] sm:$0xff] %v2065
      %s2068 = smul.u32 2, %s16
      %p2069 = scmp.lt.s32.totalorder %s2068, 3
      %s2070 = scalar_select %p2069, %s2068, 3
      %s2071 = smul.addr %s2070, 8
      %s2072 = scalar_lea.vmem %s5, %s2071
      // Predicated region
      $region41: #{cnn_intent_classifier_forward.1} parent=39 // pred_check
        %p2073 = pneg %p144
      $region42: #{cnn_intent_classifier_forward.1} parent=39 // pred_check_branch
        %2075 = sbr.rel (%p2073) target = $region44
      $region43: #{cnn_intent_classifier_forward.1} parent=39 // pred_region
        %s2076 = smul.u32 2, %s16
      $region44: #{cnn_intent_classifier_forward.1} parent=39 // pred_fallthru
        _
    $region40: #{cnn_intent_classifier_forward.1} parent=5 // pred_fallthru
      _
    %p2077 = scmp.le.s32.totalorder 2, %s11
    // Predicated region
    $region45: #{cnn_intent_classifier_forward.1} parent=5 // pred_check
      %p2078 = pneg %p2077
    $region46: #{cnn_intent_classifier_forward.1} parent=5 // pred_check_branch
      %2080 = sbr.rel (%p2078) target = $region48
    $region47: #{cnn_intent_classifier_forward.1} parent=5 // pred_region
      %s2081 = ssub.s32 %s11, 2
      // Predicated region
      $region49: #{cnn_intent_classifier_forward.1} parent=47 // pred_check
        %p2082 = pneg %p150
      $region50: #{cnn_intent_classifier_forward.1} parent=47 // pred_check_branch
        %2084 = sbr.rel (%p2082) target = $region52
      $region51: #{cnn_intent_classifier_forward.1} parent=47 // pred_region
        %s2085 = smul.u32 2, %s17
        %p2086 = scmp.lt.s32.totalorder %s2085, 3
        %s2087 = scalar_select %p2086, %s2085, 3
        %s2088 = smul.addr %s2087, 8
        %s2089 = scalar_lea.vmem %s5, %s2088
      $region52: #{cnn_intent_classifier_forward.1} parent=47 // pred_fallthru
        _
    $region48: #{cnn_intent_classifier_forward.1} parent=5 // pred_fallthru
      _
  $region6: #{cnn_intent_classifier_forward.1} parent=0 // loop_footer
    %s15 = sadd.s32 1, %s11
  $region7: #{cnn_intent_classifier_forward.1} parent=0 // loop_footer_branch
    %10 = sbr.rel target = $region3
  $region8: #{cnn_intent_classifier_forward.1} parent=0 // loop_exit
    _

</llo_original>
